<compile_context>
chip_gen: v7x
topology: tpu7x:2x2x1
jax: 0.10.0
libtpu: 0.0.40
codegen_flags: <defaults>
</compile_context>

<pallas_src>
import functools

import jax
import jax.numpy as jnp
from jax.experimental import pallas as pl
from jax.experimental.pallas import tpu as pltpu


# ----------------------------------------------------------------------------
# Phase 1: hoisted Linear -> LeakyReLU -> W_ih matmuls over all B*S rows.
# ----------------------------------------------------------------------------
def gi_kernel(x_ref, wlin_ref, blin_ref, wih_ref, bgi_ref, gi_ref):
    # x_ref: (TM, F)  wlin_ref: (F, F)  blin_ref: (1, F)
    # wih_ref: (F, 3H)  bgi_ref: (1, 3H)  gi_ref: (TM, 3H)
    a = jnp.dot(x_ref[...], wlin_ref[...],
                preferred_element_type=jnp.float32) + blin_ref[...]
    a = jnp.where(a >= 0.0, a, 0.01 * a)                 # LeakyReLU (slope 0.01)
    gi_ref[...] = (jnp.dot(a, wih_ref[...],
                           preferred_element_type=jnp.float32)
                   + bgi_ref[...]).astype(gi_ref.dtype)


# ----------------------------------------------------------------------------
# Phase 2: GRU recurrence.  Hidden state carried in the resident output block.
# ----------------------------------------------------------------------------
def gru_kernel(gi_ref, whh_ref, bhn_ref, h_ref, *, H, T_blk, S):
    # gi_ref: (B_blk, T_blk, 3H)  whh_ref: (H, 3H)  bhn_ref: (1, H)  h_ref: (B_blk, H)
    s_blk = pl.program_id(1)

    @pl.when(s_blk == 0)
    def _():
        h_ref[...] = jnp.zeros_like(h_ref)

    h = h_ref[...]
    whh = whh_ref[...]
    bhn = bhn_ref[...]
    mask_time = (S % T_blk) != 0                         # static

    for t in range(T_blk):                               # static unroll (tiny tensors)
        gi_t = gi_ref[:, t, :]                           # (B_blk, 3H), static slice
        gh = jnp.dot(h, whh, preferred_element_type=jnp.float32)
        r = jax.nn.sigmoid(gi_t[:, 0 * H:1 * H] + gh[:, 0 * H:1 * H])
        z = jax.nn.sigmoid(gi_t[:, 1 * H:2 * H] + gh[:, 1 * H:2 * H])
        n = jnp.tanh(gi_t[:, 2 * H:3 * H] + r * (gh[:, 2 * H:3 * H] + bhn))
        h_new = n + z * (h - n)                          # == (1-z)*n + z*h
        if mask_time:                                    # only emitted if S % T_blk != 0
            valid = (s_blk * T_blk + t) < S
            h_new = jnp.where(valid, h_new, h)
        h = h_new

    h_ref[...] = h


# ----------------------------------------------------------------------------
# Wrapper
# ----------------------------------------------------------------------------
def feature_extractor(x, params):
    """x: (B, S, F) float32.  Returns (B, H) == stock_latent[:, -1, :]."""
    B, S, F = x.shape
    H = params["w_hh"].shape[0]
    G = 3 * H

    # ---- Phase 1: GI = LeakyReLU(x @ W_lin + b_lin) @ W_ih + fused biases ----
    x2d = x.reshape(B * S, F)                            # free row-major view
    b_gi = params["b_ih"] + jnp.concatenate(
        [params["b_hh"][:, :2 * H],
         jnp.zeros((1, H), params["b_hh"].dtype)], axis=1)

    M = B * S
    TM = M if M <= 512 else 512                          # full block or 512-row tiles
    gi2d = pl.pallas_call(
        gi_kernel,
        out_shape=jax.ShapeDtypeStruct((M, G), jnp.float32),
        grid=(pl.cdiv(M, TM),),
        in_specs=[
            pl.BlockSpec((TM, F), lambda i: (i, 0)),
            pl.BlockSpec((F, F), lambda i: (0, 0)),
            pl.BlockSpec((1, F), lambda i: (0, 0)),
            pl.BlockSpec((F, G), lambda i: (0, 0)),
            pl.BlockSpec((1, G), lambda i: (0, 0)),
        ],
        out_specs=pl.BlockSpec((TM, G), lambda i: (i, 0)),
        compiler_params=pltpu.CompilerParams(
            dimension_semantics=("parallel",),
            vmem_limit_bytes=32 * 1024 * 1024),
    )(x2d, params["w_lin"], params["b_lin"], params["w_ih"], b_gi)

    gi3 = gi2d.reshape(B, S, G)                          # free view

    # ---- Phase 2: sequential recurrence streaming GI blocks ----
    T_blk = S if S <= 32 else 16                         # multiple of 8 (or full S)
    B_blk = B if B <= 128 else 128
    b_hn = params["b_hh"][:, 2 * H:]                     # (1, H) n-gate hidden bias

    out = pl.pallas_call(
        functools.partial(gru_kernel, H=H, T_blk=T_blk, S=S),
        out_shape=jax.ShapeDtypeStruct((B, H), jnp.float32),
        grid=(pl.cdiv(B, B_blk), pl.cdiv(S, T_blk)),
        in_specs=[
            pl.BlockSpec((B_blk, T_blk, G), lambda b, s: (b, s, 0)),
            pl.BlockSpec((H, G), lambda b, s: (0, 0)),
            pl.BlockSpec((1, H), lambda b, s: (0, 0)),
        ],
        out_specs=pl.BlockSpec((B_blk, H), lambda b, s: (b, 0)),
        compiler_params=pltpu.CompilerParams(
            dimension_semantics=("parallel", "arbitrary"),
            vmem_limit_bytes=32 * 1024 * 1024),
    )(gi3, params["w_hh"], b_hn)
    return out


# ----------------------------------------------------------------------------
# Parameters & pure-JAX reference (mirrors the PyTorch module)
# ----------------------------------------------------------------------------
def init_params(key, feat_dim, hidden_dim):
    ks = jax.random.split(key, 7)
    s_lin = 1.0 / jnp.sqrt(feat_dim)
    s_gru = 1.0 / jnp.sqrt(hidden_dim)
    return {
        # nn.Linear(feat_dim, feat_dim): weight (F,F), bias (F,) — stored transposed.
        "w_lin": jax.random.uniform(ks[0], (feat_dim, feat_dim), jnp.float32, -s_lin, s_lin),
        "b_lin": jax.random.uniform(ks[1], (1, feat_dim), jnp.float32, -s_lin, s_lin),
        # nn.GRU(feat_dim, hidden_dim, 1): weight_ih (3H,F), weight_hh (3H,H) — transposed.
        "w_ih": jax.random.uniform(ks[2], (feat_dim, 3 * hidden_dim), jnp.float32, -s_gru, s_gru),
        "w_hh": jax.random.uniform(ks[3], (hidden_dim, 3 * hidden_dim), jnp.float32, -s_gru, s_gru),
        "b_ih": jax.random.uniform(ks[4], (1, 3 * hidden_dim), jnp.float32, -s_gru, s_gru),
        "b_hh": jax.random.uniform(ks[5], (1, 3 * hidden_dim), jnp.float32, -s_gru, s_gru),
    }


def reference_forward(x, p):
    B, S, F = x.shape
    H = p["w_hh"].shape[0]
    a = x @ p["w_lin"] + p["b_lin"][0]
    a = jnp.where(a >= 0.0, a, 0.01 * a)
    h = jnp.zeros((B, H), jnp.float32)
    for t in range(S):
        gi = a[:, t, :] @ p["w_ih"] + p["b_ih"][0]
        gh = h @ p["w_hh"] + p["b_hh"][0]
        r = jax.nn.sigmoid(gi[:, :H] + gh[:, :H])
        z = jax.nn.sigmoid(gi[:, H:2 * H] + gh[:, H:2 * H])
        n = jnp.tanh(gi[:, 2 * H:] + r * gh[:, 2 * H:])
        h = (1.0 - z) * n + z * h
    return h


if __name__ == "__main__":
    feat_dim, hidden_dim = 32, 32
    batch, seq = 4, 8

    key = jax.random.PRNGKey(0)
    k_x, k_p = jax.random.split(key)
    x = jax.random.normal(k_x, (batch, seq, feat_dim), jnp.float32)
    params = init_params(k_p, feat_dim, hidden_dim)

    fe = jax.jit(feature_extractor)
    out = jax.block_until_ready(fe(x, params))

    ref = reference_forward(x, params)
    assert out.shape == (batch, hidden_dim)
    assert jnp.allclose(out, ref, atol=1e-4, rtol=1e-4), "mismatch vs reference"

    print("KERNEL_OK")
</pallas_src>

<mosaic_0001>
module attributes {stable_mosaic.version = 11 : i64} {
  func.func @gi_kernel(%arg0: i32, %arg1: memref<32x32xf32, #tpu.memory_space<vmem>>, %arg2: memref<32x32xf32, #tpu.memory_space<vmem>>, %arg3: memref<1x32xf32, #tpu.memory_space<vmem>>, %arg4: memref<32x96xf32, #tpu.memory_space<vmem>>, %arg5: memref<1x96xf32, #tpu.memory_space<vmem>>, %arg6: memref<32x96xf32, #tpu.memory_space<vmem>>) attributes {dimension_semantics = [#tpu.dimension_semantics<parallel>], iteration_bounds = array<i64: 1>, scalar_prefetch = 0 : i64, scratch_operands = 0 : i64, tpu.core_type = #tpu.core_type<tc>, window_params = [{transform_indices = @transform_0, window_bounds = array<i64: 32, 32>}, {pipeline_mode = #tpu.pipeline_mode<synchronous>, transform_indices = @transform_1, window_bounds = array<i64: 32, 32>}, {pipeline_mode = #tpu.pipeline_mode<synchronous>, transform_indices = @transform_2, window_bounds = array<i64: 1, 32>}, {pipeline_mode = #tpu.pipeline_mode<synchronous>, transform_indices = @transform_3, window_bounds = array<i64: 32, 96>}, {pipeline_mode = #tpu.pipeline_mode<synchronous>, transform_indices = @transform_4, window_bounds = array<i64: 1, 96>}, {transform_indices = @transform_5, window_bounds = array<i64: 32, 96>}]} {
    %c0 = arith.constant 0 : index
    %c0_0 = arith.constant 0 : index
    %0 = vector.load %arg1[%c0, %c0_0] : memref<32x32xf32, #tpu.memory_space<vmem>>, vector<32x32xf32>
    %c0_1 = arith.constant 0 : index
    %c0_2 = arith.constant 0 : index
    %1 = vector.load %arg2[%c0_1, %c0_2] : memref<32x32xf32, #tpu.memory_space<vmem>>, vector<32x32xf32>
    %cst = arith.constant dense<0.000000e+00> : vector<32x32xf32>
    %2 = tpu.matmul %0, %1, %cst {dimension_numbers = #tpu.dot_dimension_numbers<[1], [0], [0], [1], [0, 0, 1, 1], [], []>} : vector<32x32xf32>, vector<32x32xf32>, vector<32x32xf32> -> vector<32x32xf32>
    %c0_3 = arith.constant 0 : index
    %c0_4 = arith.constant 0 : index
    %3 = vector.load %arg3[%c0_3, %c0_4] : memref<1x32xf32, #tpu.memory_space<vmem>>, vector<1x32xf32>
    %4 = vector.broadcast %3 : vector<1x32xf32> to vector<32x32xf32>
    %5 = arith.addf %2, %4 : vector<32x32xf32>
    %cst_5 = arith.constant 0.000000e+00 : f32
    %6 = vector.broadcast %cst_5 : f32 to vector<32x32xf32>
    %7 = arith.cmpf oge, %5, %6 : vector<32x32xf32>
    %cst_6 = arith.constant 0.00999999977 : f32
    %8 = vector.broadcast %cst_6 : f32 to vector<32x32xf32>
    %9 = arith.mulf %8, %5 : vector<32x32xf32>
    %10 = arith.select %7, %5, %9 : vector<32x32xi1>, vector<32x32xf32>
    %c0_7 = arith.constant 0 : index
    %c0_8 = arith.constant 0 : index
    %11 = vector.load %arg4[%c0_7, %c0_8] : memref<32x96xf32, #tpu.memory_space<vmem>>, vector<32x96xf32>
    %cst_9 = arith.constant dense<0.000000e+00> : vector<32x96xf32>
    %12 = tpu.matmul %10, %11, %cst_9 {dimension_numbers = #tpu.dot_dimension_numbers<[1], [0], [0], [1], [0, 0, 1, 1], [], []>} : vector<32x32xf32>, vector<32x96xf32>, vector<32x96xf32> -> vector<32x96xf32>
    %c0_10 = arith.constant 0 : index
    %c0_11 = arith.constant 0 : index
    %13 = vector.load %arg5[%c0_10, %c0_11] : memref<1x96xf32, #tpu.memory_space<vmem>>, vector<1x96xf32>
    %14 = vector.broadcast %13 : vector<1x96xf32> to vector<32x96xf32>
    %15 = arith.addf %12, %14 : vector<32x96xf32>
    %c0_12 = arith.constant 0 : index
    %c0_13 = arith.constant 0 : index
    %16 = vector.load %arg6[%c0_12, %c0_13] : memref<32x96xf32, #tpu.memory_space<vmem>>, vector<32x96xf32>
    tpu.vector_store %arg6[%c0_12, %c0_13], %15 {strides = array<i32>} : memref<32x96xf32, #tpu.memory_space<vmem>>, vector<32x96xf32>,
    return
  }
  func.func @transform_0(%arg0: i32) -> (i32, i32) {
    %c0_i32 = arith.constant 0 : i32
    %c0_i32_0 = arith.constant 0 : i32
    return %arg0, %c0_i32 : i32, i32
  }
  func.func @transform_1(%arg0: i32) -> (i32, i32) {
    %c0_i32 = arith.constant 0 : i32
    %c0_i32_0 = arith.constant 0 : i32
    %c0_i32_1 = arith.constant 0 : i32
    return %c0_i32, %c0_i32_0 : i32, i32
  }
  func.func @transform_2(%arg0: i32) -> (i32, i32) {
    %c0_i32 = arith.constant 0 : i32
    %c0_i32_0 = arith.constant 0 : i32
    %c0_i32_1 = arith.constant 0 : i32
    return %c0_i32, %c0_i32_0 : i32, i32
  }
  func.func @transform_3(%arg0: i32) -> (i32, i32) {
    %c0_i32 = arith.constant 0 : i32
    %c0_i32_0 = arith.constant 0 : i32
    %c0_i32_1 = arith.constant 0 : i32
    return %c0_i32, %c0_i32_0 : i32, i32
  }
  func.func @transform_4(%arg0: i32) -> (i32, i32) {
    %c0_i32 = arith.constant 0 : i32
    %c0_i32_0 = arith.constant 0 : i32
    %c0_i32_1 = arith.constant 0 : i32
    return %c0_i32, %c0_i32_0 : i32, i32
  }
  func.func @transform_5(%arg0: i32) -> (i32, i32) {
    %c0_i32 = arith.constant 0 : i32
    %c0_i32_0 = arith.constant 0 : i32
    return %arg0, %c0_i32 : i32, i32
  }
}

module attributes {stable_mosaic.version = 11 : i64} {
  func.func @gru_kernel(%arg0: i32, %arg1: i32, %arg2: memref<4x8x96xf32, #tpu.memory_space<vmem>>, %arg3: memref<32x96xf32, #tpu.memory_space<vmem>>, %arg4: memref<1x32xf32, #tpu.memory_space<vmem>>, %arg5: memref<4x32xf32, #tpu.memory_space<vmem>>) attributes {dimension_semantics = [#tpu.dimension_semantics<parallel>, #tpu.dimension_semantics<arbitrary>], iteration_bounds = array<i64: 1, 1>, scalar_prefetch = 0 : i64, scratch_operands = 0 : i64, tpu.core_type = #tpu.core_type<tc>, window_params = [{transform_indices = @transform_0, window_bounds = array<i64: 4, 8, 96>}, {pipeline_mode = #tpu.pipeline_mode<synchronous>, transform_indices = @transform_1, window_bounds = array<i64: 32, 96>}, {pipeline_mode = #tpu.pipeline_mode<synchronous>, transform_indices = @transform_2, window_bounds = array<i64: 1, 32>}, {transform_indices = @transform_3, window_bounds = array<i64: 4, 32>}]} {
    %c0_i32 = arith.constant 0 : i32
    %0 = arith.cmpi eq, %arg1, %c0_i32 : i32
    %1 = arith.extui %0 : i1 to i32
    %c0_i32_0 = arith.constant 0 : i32
    %2 = arith.cmpi ne, %1, %c0_i32_0 : i32
    scf.if %2 {
      %cst_48 = arith.constant 0.000000e+00 : f32
      %239 = vector.broadcast %cst_48 : f32 to vector<4x32xf32>
      %c0_49 = arith.constant 0 : index
      %c0_50 = arith.constant 0 : index
      %240 = vector.load %arg5[%c0_49, %c0_50] : memref<4x32xf32, #tpu.memory_space<vmem>>, vector<4x32xf32>
      tpu.vector_store %arg5[%c0_49, %c0_50], %239 {strides = array<i32>} : memref<4x32xf32, #tpu.memory_space<vmem>>, vector<4x32xf32>,
    } else {
    }
    %c0 = arith.constant 0 : index
    %c0_1 = arith.constant 0 : index
    %3 = vector.load %arg5[%c0, %c0_1] : memref<4x32xf32, #tpu.memory_space<vmem>>, vector<4x32xf32>
    %c0_2 = arith.constant 0 : index
    %c0_3 = arith.constant 0 : index
    %4 = vector.load %arg3[%c0_2, %c0_3] : memref<32x96xf32, #tpu.memory_space<vmem>>, vector<32x96xf32>
    %c0_4 = arith.constant 0 : index
    %c0_5 = arith.constant 0 : index
    %5 = vector.load %arg4[%c0_4, %c0_5] : memref<1x32xf32, #tpu.memory_space<vmem>>, vector<1x32xf32>
    %c0_6 = arith.constant 0 : index
    %c0_7 = arith.constant 0 : index
    %c0_8 = arith.constant 0 : index
    %6 = vector.load %arg2[%c0_6, %c0_7, %c0_8] : memref<4x8x96xf32, #tpu.memory_space<vmem>>, vector<4x1x96xf32>
    %7 = vector.shape_cast %6 : vector<4x1x96xf32> to vector<4x96xf32>
    %cst = arith.constant dense<0.000000e+00> : vector<4x96xf32>
    %8 = tpu.matmul %3, %4, %cst {dimension_numbers = #tpu.dot_dimension_numbers<[1], [0], [0], [1], [0, 0, 1, 1], [], []>} : vector<4x32xf32>, vector<32x96xf32>, vector<4x96xf32> -> vector<4x96xf32>
    %9 = vector.extract_strided_slice %7 {offsets = [0, 0], sizes = [4, 32], strides = [1, 1]} : vector<4x96xf32> to vector<4x32xf32>
    %10 = vector.extract_strided_slice %8 {offsets = [0, 0], sizes = [4, 32], strides = [1, 1]} : vector<4x96xf32> to vector<4x32xf32>
    %11 = arith.addf %9, %10 : vector<4x32xf32>
    %12 = arith.negf %11 : vector<4x32xf32>
    %13 = math.exp %12 : vector<4x32xf32>
    %cst_9 = arith.constant 1.000000e+00 : f32
    %14 = vector.broadcast %cst_9 : f32 to vector<4x32xf32>
    %15 = arith.addf %14, %13 : vector<4x32xf32>
    %16 = arith.divf %14, %15 : vector<4x32xf32>
    %17 = vector.extract_strided_slice %7 {offsets = [0, 32], sizes = [4, 32], strides = [1, 1]} : vector<4x96xf32> to vector<4x32xf32>
    %18 = vector.extract_strided_slice %8 {offsets = [0, 32], sizes = [4, 32], strides = [1, 1]} : vector<4x96xf32> to vector<4x32xf32>
    %19 = arith.addf %17, %18 : vector<4x32xf32>
    %20 = arith.negf %19 : vector<4x32xf32>
    %21 = math.exp %20 : vector<4x32xf32>
    %cst_10 = arith.constant 1.000000e+00 : f32
    %22 = vector.broadcast %cst_10 : f32 to vector<4x32xf32>
    %23 = arith.addf %22, %21 : vector<4x32xf32>
    %24 = arith.divf %22, %23 : vector<4x32xf32>
    %25 = vector.extract_strided_slice %7 {offsets = [0, 64], sizes = [4, 32], strides = [1, 1]} : vector<4x96xf32> to vector<4x32xf32>
    %26 = vector.extract_strided_slice %8 {offsets = [0, 64], sizes = [4, 32], strides = [1, 1]} : vector<4x96xf32> to vector<4x32xf32>
    %27 = vector.broadcast %5 : vector<1x32xf32> to vector<4x32xf32>
    %28 = arith.addf %26, %27 : vector<4x32xf32>
    %29 = arith.mulf %16, %28 : vector<4x32xf32>
    %30 = arith.addf %25, %29 : vector<4x32xf32>
    %31 = math.tanh %30 : vector<4x32xf32>
    %32 = arith.subf %3, %31 : vector<4x32xf32>
    %33 = arith.mulf %24, %32 : vector<4x32xf32>
    %34 = arith.addf %31, %33 : vector<4x32xf32>
    %c0_11 = arith.constant 0 : index
    %c1 = arith.constant 1 : index
    %c0_12 = arith.constant 0 : index
    %35 = vector.load %arg2[%c0_11, %c1, %c0_12] : memref<4x8x96xf32, #tpu.memory_space<vmem>>, vector<4x1x96xf32>
    %36 = vector.shape_cast %35 : vector<4x1x96xf32> to vector<4x96xf32>
    %cst_13 = arith.constant dense<0.000000e+00> : vector<4x96xf32>
    %37 = tpu.matmul %34, %4, %cst_13 {dimension_numbers = #tpu.dot_dimension_numbers<[1], [0], [0], [1], [0, 0, 1, 1], [], []>} : vector<4x32xf32>, vector<32x96xf32>, vector<4x96xf32> -> vector<4x96xf32>
    %38 = vector.extract_strided_slice %36 {offsets = [0, 0], sizes = [4, 32], strides = [1, 1]} : vector<4x96xf32> to vector<4x32xf32>
    %39 = vector.extract_strided_slice %37 {offsets = [0, 0], sizes = [4, 32], strides = [1, 1]} : vector<4x96xf32> to vector<4x32xf32>
    %40 = arith.addf %38, %39 : vector<4x32xf32>
    %41 = arith.negf %40 : vector<4x32xf32>
    %42 = math.exp %41 : vector<4x32xf32>
    %cst_14 = arith.constant 1.000000e+00 : f32
    %43 = vector.broadcast %cst_14 : f32 to vector<4x32xf32>
    %44 = arith.addf %43, %42 : vector<4x32xf32>
    %45 = arith.divf %43, %44 : vector<4x32xf32>
    %46 = vector.extract_strided_slice %36 {offsets = [0, 32], sizes = [4, 32], strides = [1, 1]} : vector<4x96xf32> to vector<4x32xf32>
    %47 = vector.extract_strided_slice %37 {offsets = [0, 32], sizes = [4, 32], strides = [1, 1]} : vector<4x96xf32> to vector<4x32xf32>
    %48 = arith.addf %46, %47 : vector<4x32xf32>
    %49 = arith.negf %48 : vector<4x32xf32>
    %50 = math.exp %49 : vector<4x32xf32>
    %cst_15 = arith.constant 1.000000e+00 : f32
    %51 = vector.broadcast %cst_15 : f32 to vector<4x32xf32>
    %52 = arith.addf %51, %50 : vector<4x32xf32>
    %53 = arith.divf %51, %52 : vector<4x32xf32>
    %54 = vector.extract_strided_slice %36 {offsets = [0, 64], sizes = [4, 32], strides = [1, 1]} : vector<4x96xf32> to vector<4x32xf32>
    %55 = vector.extract_strided_slice %37 {offsets = [0, 64], sizes = [4, 32], strides = [1, 1]} : vector<4x96xf32> to vector<4x32xf32>
    %56 = vector.broadcast %5 : vector<1x32xf32> to vector<4x32xf32>
    %57 = arith.addf %55, %56 : vector<4x32xf32>
    %58 = arith.mulf %45, %57 : vector<4x32xf32>
    %59 = arith.addf %54, %58 : vector<4x32xf32>
    %60 = math.tanh %59 : vector<4x32xf32>
    %61 = arith.subf %34, %60 : vector<4x32xf32>
    %62 = arith.mulf %53, %61 : vector<4x32xf32>
    %63 = arith.addf %60, %62 : vector<4x32xf32>
    %c0_16 = arith.constant 0 : index
    %c2 = arith.constant 2 : index
    %c0_17 = arith.constant 0 : index
    %64 = vector.load %arg2[%c0_16, %c2, %c0_17] : memref<4x8x96xf32, #tpu.memory_space<vmem>>, vector<4x1x96xf32>
    %65 = vector.shape_cast %64 : vector<4x1x96xf32> to vector<4x96xf32>
    %cst_18 = arith.constant dense<0.000000e+00> : vector<4x96xf32>
    %66 = tpu.matmul %63, %4, %cst_18 {dimension_numbers = #tpu.dot_dimension_numbers<[1], [0], [0], [1], [0, 0, 1, 1], [], []>} : vector<4x32xf32>, vector<32x96xf32>, vector<4x96xf32> -> vector<4x96xf32>
    %67 = vector.extract_strided_slice %65 {offsets = [0, 0], sizes = [4, 32], strides = [1, 1]} : vector<4x96xf32> to vector<4x32xf32>
    %68 = vector.extract_strided_slice %66 {offsets = [0, 0], sizes = [4, 32], strides = [1, 1]} : vector<4x96xf32> to vector<4x32xf32>
    %69 = arith.addf %67, %68 : vector<4x32xf32>
    %70 = arith.negf %69 : vector<4x32xf32>
    %71 = math.exp %70 : vector<4x32xf32>
    %cst_19 = arith.constant 1.000000e+00 : f32
    %72 = vector.broadcast %cst_19 : f32 to vector<4x32xf32>
    %73 = arith.addf %72, %71 : vector<4x32xf32>
    %74 = arith.divf %72, %73 : vector<4x32xf32>
    %75 = vector.extract_strided_slice %65 {offsets = [0, 32], sizes = [4, 32], strides = [1, 1]} : vector<4x96xf32> to vector<4x32xf32>
    %76 = vector.extract_strided_slice %66 {offsets = [0, 32], sizes = [4, 32], strides = [1, 1]} : vector<4x96xf32> to vector<4x32xf32>
    %77 = arith.addf %75, %76 : vector<4x32xf32>
    %78 = arith.negf %77 : vector<4x32xf32>
    %79 = math.exp %78 : vector<4x32xf32>
    %cst_20 = arith.constant 1.000000e+00 : f32
    %80 = vector.broadcast %cst_20 : f32 to vector<4x32xf32>
    %81 = arith.addf %80, %79 : vector<4x32xf32>
    %82 = arith.divf %80, %81 : vector<4x32xf32>
    %83 = vector.extract_strided_slice %65 {offsets = [0, 64], sizes = [4, 32], strides = [1, 1]} : vector<4x96xf32> to vector<4x32xf32>
    %84 = vector.extract_strided_slice %66 {offsets = [0, 64], sizes = [4, 32], strides = [1, 1]} : vector<4x96xf32> to vector<4x32xf32>
    %85 = vector.broadcast %5 : vector<1x32xf32> to vector<4x32xf32>
    %86 = arith.addf %84, %85 : vector<4x32xf32>
    %87 = arith.mulf %74, %86 : vector<4x32xf32>
    %88 = arith.addf %83, %87 : vector<4x32xf32>
    %89 = math.tanh %88 : vector<4x32xf32>
    %90 = arith.subf %63, %89 : vector<4x32xf32>
    %91 = arith.mulf %82, %90 : vector<4x32xf32>
    %92 = arith.addf %89, %91 : vector<4x32xf32>
    %c0_21 = arith.constant 0 : index
    %c3 = arith.constant 3 : index
    %c0_22 = arith.constant 0 : index
    %93 = vector.load %arg2[%c0_21, %c3, %c0_22] : memref<4x8x96xf32, #tpu.memory_space<vmem>>, vector<4x1x96xf32>
    %94 = vector.shape_cast %93 : vector<4x1x96xf32> to vector<4x96xf32>
    %cst_23 = arith.constant dense<0.000000e+00> : vector<4x96xf32>
    %95 = tpu.matmul %92, %4, %cst_23 {dimension_numbers = #tpu.dot_dimension_numbers<[1], [0], [0], [1], [0, 0, 1, 1], [], []>} : vector<4x32xf32>, vector<32x96xf32>, vector<4x96xf32> -> vector<4x96xf32>
    %96 = vector.extract_strided_slice %94 {offsets = [0, 0], sizes = [4, 32], strides = [1, 1]} : vector<4x96xf32> to vector<4x32xf32>
    %97 = vector.extract_strided_slice %95 {offsets = [0, 0], sizes = [4, 32], strides = [1, 1]} : vector<4x96xf32> to vector<4x32xf32>
    %98 = arith.addf %96, %97 : vector<4x32xf32>
    %99 = arith.negf %98 : vector<4x32xf32>
    %100 = math.exp %99 : vector<4x32xf32>
    %cst_24 = arith.constant 1.000000e+00 : f32
    %101 = vector.broadcast %cst_24 : f32 to vector<4x32xf32>
    %102 = arith.addf %101, %100 : vector<4x32xf32>
    %103 = arith.divf %101, %102 : vector<4x32xf32>
    %104 = vector.extract_strided_slice %94 {offsets = [0, 32], sizes = [4, 32], strides = [1, 1]} : vector<4x96xf32> to vector<4x32xf32>
    %105 = vector.extract_strided_slice %95 {offsets = [0, 32], sizes = [4, 32], strides = [1, 1]} : vector<4x96xf32> to vector<4x32xf32>
    %106 = arith.addf %104, %105 : vector<4x32xf32>
    %107 = arith.negf %106 : vector<4x32xf32>
    %108 = math.exp %107 : vector<4x32xf32>
    %cst_25 = arith.constant 1.000000e+00 : f32
    %109 = vector.broadcast %cst_25 : f32 to vector<4x32xf32>
    %110 = arith.addf %109, %108 : vector<4x32xf32>
    %111 = arith.divf %109, %110 : vector<4x32xf32>
    %112 = vector.extract_strided_slice %94 {offsets = [0, 64], sizes = [4, 32], strides = [1, 1]} : vector<4x96xf32> to vector<4x32xf32>
    %113 = vector.extract_strided_slice %95 {offsets = [0, 64], sizes = [4, 32], strides = [1, 1]} : vector<4x96xf32> to vector<4x32xf32>
    %114 = vector.broadcast %5 : vector<1x32xf32> to vector<4x32xf32>
    %115 = arith.addf %113, %114 : vector<4x32xf32>
    %116 = arith.mulf %103, %115 : vector<4x32xf32>
    %117 = arith.addf %112, %116 : vector<4x32xf32>
    %118 = math.tanh %117 : vector<4x32xf32>
    %119 = arith.subf %92, %118 : vector<4x32xf32>
    %120 = arith.mulf %111, %119 : vector<4x32xf32>
    %121 = arith.addf %118, %120 : vector<4x32xf32>
    %c0_26 = arith.constant 0 : index
    %c4 = arith.constant 4 : index
    %c0_27 = arith.constant 0 : index
    %122 = vector.load %arg2[%c0_26, %c4, %c0_27] : memref<4x8x96xf32, #tpu.memory_space<vmem>>, vector<4x1x96xf32>
    %123 = vector.shape_cast %122 : vector<4x1x96xf32> to vector<4x96xf32>
    %cst_28 = arith.constant dense<0.000000e+00> : vector<4x96xf32>
    %124 = tpu.matmul %121, %4, %cst_28 {dimension_numbers = #tpu.dot_dimension_numbers<[1], [0], [0], [1], [0, 0, 1, 1], [], []>} : vector<4x32xf32>, vector<32x96xf32>, vector<4x96xf32> -> vector<4x96xf32>
    %125 = vector.extract_strided_slice %123 {offsets = [0, 0], sizes = [4, 32], strides = [1, 1]} : vector<4x96xf32> to vector<4x32xf32>
    %126 = vector.extract_strided_slice %124 {offsets = [0, 0], sizes = [4, 32], strides = [1, 1]} : vector<4x96xf32> to vector<4x32xf32>
    %127 = arith.addf %125, %126 : vector<4x32xf32>
    %128 = arith.negf %127 : vector<4x32xf32>
    %129 = math.exp %128 : vector<4x32xf32>
    %cst_29 = arith.constant 1.000000e+00 : f32
    %130 = vector.broadcast %cst_29 : f32 to vector<4x32xf32>
    %131 = arith.addf %130, %129 : vector<4x32xf32>
    %132 = arith.divf %130, %131 : vector<4x32xf32>
    %133 = vector.extract_strided_slice %123 {offsets = [0, 32], sizes = [4, 32], strides = [1, 1]} : vector<4x96xf32> to vector<4x32xf32>
    %134 = vector.extract_strided_slice %124 {offsets = [0, 32], sizes = [4, 32], strides = [1, 1]} : vector<4x96xf32> to vector<4x32xf32>
    %135 = arith.addf %133, %134 : vector<4x32xf32>
    %136 = arith.negf %135 : vector<4x32xf32>
    %137 = math.exp %136 : vector<4x32xf32>
    %cst_30 = arith.constant 1.000000e+00 : f32
    %138 = vector.broadcast %cst_30 : f32 to vector<4x32xf32>
    %139 = arith.addf %138, %137 : vector<4x32xf32>
    %140 = arith.divf %138, %139 : vector<4x32xf32>
    %141 = vector.extract_strided_slice %123 {offsets = [0, 64], sizes = [4, 32], strides = [1, 1]} : vector<4x96xf32> to vector<4x32xf32>
    %142 = vector.extract_strided_slice %124 {offsets = [0, 64], sizes = [4, 32], strides = [1, 1]} : vector<4x96xf32> to vector<4x32xf32>
    %143 = vector.broadcast %5 : vector<1x32xf32> to vector<4x32xf32>
    %144 = arith.addf %142, %143 : vector<4x32xf32>
    %145 = arith.mulf %132, %144 : vector<4x32xf32>
    %146 = arith.addf %141, %145 : vector<4x32xf32>
    %147 = math.tanh %146 : vector<4x32xf32>
    %148 = arith.subf %121, %147 : vector<4x32xf32>
    %149 = arith.mulf %140, %148 : vector<4x32xf32>
    %150 = arith.addf %147, %149 : vector<4x32xf32>
    %c0_31 = arith.constant 0 : index
    %c5 = arith.constant 5 : index
    %c0_32 = arith.constant 0 : index
    %151 = vector.load %arg2[%c0_31, %c5, %c0_32] : memref<4x8x96xf32, #tpu.memory_space<vmem>>, vector<4x1x96xf32>
    %152 = vector.shape_cast %151 : vector<4x1x96xf32> to vector<4x96xf32>
    %cst_33 = arith.constant dense<0.000000e+00> : vector<4x96xf32>
    %153 = tpu.matmul %150, %4, %cst_33 {dimension_numbers = #tpu.dot_dimension_numbers<[1], [0], [0], [1], [0, 0, 1, 1], [], []>} : vector<4x32xf32>, vector<32x96xf32>, vector<4x96xf32> -> vector<4x96xf32>
    %154 = vector.extract_strided_slice %152 {offsets = [0, 0], sizes = [4, 32], strides = [1, 1]} : vector<4x96xf32> to vector<4x32xf32>
    %155 = vector.extract_strided_slice %153 {offsets = [0, 0], sizes = [4, 32], strides = [1, 1]} : vector<4x96xf32> to vector<4x32xf32>
    %156 = arith.addf %154, %155 : vector<4x32xf32>
    %157 = arith.negf %156 : vector<4x32xf32>
    %158 = math.exp %157 : vector<4x32xf32>
    %cst_34 = arith.constant 1.000000e+00 : f32
    %159 = vector.broadcast %cst_34 : f32 to vector<4x32xf32>
    %160 = arith.addf %159, %158 : vector<4x32xf32>
    %161 = arith.divf %159, %160 : vector<4x32xf32>
    %162 = vector.extract_strided_slice %152 {offsets = [0, 32], sizes = [4, 32], strides = [1, 1]} : vector<4x96xf32> to vector<4x32xf32>
    %163 = vector.extract_strided_slice %153 {offsets = [0, 32], sizes = [4, 32], strides = [1, 1]} : vector<4x96xf32> to vector<4x32xf32>
    %164 = arith.addf %162, %163 : vector<4x32xf32>
    %165 = arith.negf %164 : vector<4x32xf32>
    %166 = math.exp %165 : vector<4x32xf32>
    %cst_35 = arith.constant 1.000000e+00 : f32
    %167 = vector.broadcast %cst_35 : f32 to vector<4x32xf32>
    %168 = arith.addf %167, %166 : vector<4x32xf32>
    %169 = arith.divf %167, %168 : vector<4x32xf32>
    %170 = vector.extract_strided_slice %152 {offsets = [0, 64], sizes = [4, 32], strides = [1, 1]} : vector<4x96xf32> to vector<4x32xf32>
    %171 = vector.extract_strided_slice %153 {offsets = [0, 64], sizes = [4, 32], strides = [1, 1]} : vector<4x96xf32> to vector<4x32xf32>
    %172 = vector.broadcast %5 : vector<1x32xf32> to vector<4x32xf32>
    %173 = arith.addf %171, %172 : vector<4x32xf32>
    %174 = arith.mulf %161, %173 : vector<4x32xf32>
    %175 = arith.addf %170, %174 : vector<4x32xf32>
    %176 = math.tanh %175 : vector<4x32xf32>
    %177 = arith.subf %150, %176 : vector<4x32xf32>
    %178 = arith.mulf %169, %177 : vector<4x32xf32>
    %179 = arith.addf %176, %178 : vector<4x32xf32>
    %c0_36 = arith.constant 0 : index
    %c6 = arith.constant 6 : index
    %c0_37 = arith.constant 0 : index
    %180 = vector.load %arg2[%c0_36, %c6, %c0_37] : memref<4x8x96xf32, #tpu.memory_space<vmem>>, vector<4x1x96xf32>
    %181 = vector.shape_cast %180 : vector<4x1x96xf32> to vector<4x96xf32>
    %cst_38 = arith.constant dense<0.000000e+00> : vector<4x96xf32>
    %182 = tpu.matmul %179, %4, %cst_38 {dimension_numbers = #tpu.dot_dimension_numbers<[1], [0], [0], [1], [0, 0, 1, 1], [], []>} : vector<4x32xf32>, vector<32x96xf32>, vector<4x96xf32> -> vector<4x96xf32>
    %183 = vector.extract_strided_slice %181 {offsets = [0, 0], sizes = [4, 32], strides = [1, 1]} : vector<4x96xf32> to vector<4x32xf32>
    %184 = vector.extract_strided_slice %182 {offsets = [0, 0], sizes = [4, 32], strides = [1, 1]} : vector<4x96xf32> to vector<4x32xf32>
    %185 = arith.addf %183, %184 : vector<4x32xf32>
    %186 = arith.negf %185 : vector<4x32xf32>
    %187 = math.exp %186 : vector<4x32xf32>
    %cst_39 = arith.constant 1.000000e+00 : f32
    %188 = vector.broadcast %cst_39 : f32 to vector<4x32xf32>
    %189 = arith.addf %188, %187 : vector<4x32xf32>
    %190 = arith.divf %188, %189 : vector<4x32xf32>
    %191 = vector.extract_strided_slice %181 {offsets = [0, 32], sizes = [4, 32], strides = [1, 1]} : vector<4x96xf32> to vector<4x32xf32>
    %192 = vector.extract_strided_slice %182 {offsets = [0, 32], sizes = [4, 32], strides = [1, 1]} : vector<4x96xf32> to vector<4x32xf32>
    %193 = arith.addf %191, %192 : vector<4x32xf32>
    %194 = arith.negf %193 : vector<4x32xf32>
    %195 = math.exp %194 : vector<4x32xf32>
    %cst_40 = arith.constant 1.000000e+00 : f32
    %196 = vector.broadcast %cst_40 : f32 to vector<4x32xf32>
    %197 = arith.addf %196, %195 : vector<4x32xf32>
    %198 = arith.divf %196, %197 : vector<4x32xf32>
    %199 = vector.extract_strided_slice %181 {offsets = [0, 64], sizes = [4, 32], strides = [1, 1]} : vector<4x96xf32> to vector<4x32xf32>
    %200 = vector.extract_strided_slice %182 {offsets = [0, 64], sizes = [4, 32], strides = [1, 1]} : vector<4x96xf32> to vector<4x32xf32>
    %201 = vector.broadcast %5 : vector<1x32xf32> to vector<4x32xf32>
    %202 = arith.addf %200, %201 : vector<4x32xf32>
    %203 = arith.mulf %190, %202 : vector<4x32xf32>
    %204 = arith.addf %199, %203 : vector<4x32xf32>
    %205 = math.tanh %204 : vector<4x32xf32>
    %206 = arith.subf %179, %205 : vector<4x32xf32>
    %207 = arith.mulf %198, %206 : vector<4x32xf32>
    %208 = arith.addf %205, %207 : vector<4x32xf32>
    %c0_41 = arith.constant 0 : index
    %c7 = arith.constant 7 : index
    %c0_42 = arith.constant 0 : index
    %209 = vector.load %arg2[%c0_41, %c7, %c0_42] : memref<4x8x96xf32, #tpu.memory_space<vmem>>, vector<4x1x96xf32>
    %210 = vector.shape_cast %209 : vector<4x1x96xf32> to vector<4x96xf32>
    %cst_43 = arith.constant dense<0.000000e+00> : vector<4x96xf32>
    %211 = tpu.matmul %208, %4, %cst_43 {dimension_numbers = #tpu.dot_dimension_numbers<[1], [0], [0], [1], [0, 0, 1, 1], [], []>} : vector<4x32xf32>, vector<32x96xf32>, vector<4x96xf32> -> vector<4x96xf32>
    %212 = vector.extract_strided_slice %210 {offsets = [0, 0], sizes = [4, 32], strides = [1, 1]} : vector<4x96xf32> to vector<4x32xf32>
    %213 = vector.extract_strided_slice %211 {offsets = [0, 0], sizes = [4, 32], strides = [1, 1]} : vector<4x96xf32> to vector<4x32xf32>
    %214 = arith.addf %212, %213 : vector<4x32xf32>
    %215 = arith.negf %214 : vector<4x32xf32>
    %216 = math.exp %215 : vector<4x32xf32>
    %cst_44 = arith.constant 1.000000e+00 : f32
    %217 = vector.broadcast %cst_44 : f32 to vector<4x32xf32>
    %218 = arith.addf %217, %216 : vector<4x32xf32>
    %219 = arith.divf %217, %218 : vector<4x32xf32>
    %220 = vector.extract_strided_slice %210 {offsets = [0, 32], sizes = [4, 32], strides = [1, 1]} : vector<4x96xf32> to vector<4x32xf32>
    %221 = vector.extract_strided_slice %211 {offsets = [0, 32], sizes = [4, 32], strides = [1, 1]} : vector<4x96xf32> to vector<4x32xf32>
    %222 = arith.addf %220, %221 : vector<4x32xf32>
    %223 = arith.negf %222 : vector<4x32xf32>
    %224 = math.exp %223 : vector<4x32xf32>
    %cst_45 = arith.constant 1.000000e+00 : f32
    %225 = vector.broadcast %cst_45 : f32 to vector<4x32xf32>
    %226 = arith.addf %225, %224 : vector<4x32xf32>
    %227 = arith.divf %225, %226 : vector<4x32xf32>
    %228 = vector.extract_strided_slice %210 {offsets = [0, 64], sizes = [4, 32], strides = [1, 1]} : vector<4x96xf32> to vector<4x32xf32>
    %229 = vector.extract_strided_slice %211 {offsets = [0, 64], sizes = [4, 32], strides = [1, 1]} : vector<4x96xf32> to vector<4x32xf32>
    %230 = vector.broadcast %5 : vector<1x32xf32> to vector<4x32xf32>
    %231 = arith.addf %229, %230 : vector<4x32xf32>
    %232 = arith.mulf %219, %231 : vector<4x32xf32>
    %233 = arith.addf %228, %232 : vector<4x32xf32>
    %234 = math.tanh %233 : vector<4x32xf32>
    %235 = arith.subf %208, %234 : vector<4x32xf32>
    %236 = arith.mulf %227, %235 : vector<4x32xf32>
    %237 = arith.addf %234, %236 : vector<4x32xf32>
    %c0_46 = arith.constant 0 : index
    %c0_47 = arith.constant 0 : index
    %238 = vector.load %arg5[%c0_46, %c0_47] : memref<4x32xf32, #tpu.memory_space<vmem>>, vector<4x32xf32>
    tpu.vector_store %arg5[%c0_46, %c0_47], %237 {strides = array<i32>} : memref<4x32xf32, #tpu.memory_space<vmem>>, vector<4x32xf32>,
    return
  }
  func.func @transform_0(%arg0: i32, %arg1: i32) -> (i32, i32, i32) {
    %c0_i32 = arith.constant 0 : i32
    %c0_i32_0 = arith.constant 0 : i32
    return %arg0, %arg1, %c0_i32 : i32, i32, i32
  }
  func.func @transform_1(%arg0: i32, %arg1: i32) -> (i32, i32) {
    %c0_i32 = arith.constant 0 : i32
    %c0_i32_0 = arith.constant 0 : i32
    %c0_i32_1 = arith.constant 0 : i32
    return %c0_i32, %c0_i32_0 : i32, i32
  }
  func.func @transform_2(%arg0: i32, %arg1: i32) -> (i32, i32) {
    %c0_i32 = arith.constant 0 : i32
    %c0_i32_0 = arith.constant 0 : i32
    %c0_i32_1 = arith.constant 0 : i32
    return %c0_i32, %c0_i32_0 : i32, i32
  }
  func.func @transform_3(%arg0: i32, %arg1: i32) -> (i32, i32) {
    %c0_i32 = arith.constant 0 : i32
    %c0_i32_0 = arith.constant 0 : i32
    return %arg0, %c0_i32 : i32, i32
  }
}

</mosaic_0001>

<llo_original>
// kernel: feature_extractor.2
$region0: #{feature_extractor.2}
  #allocation0 [shape = 'u32[]', space=smem, size = 0x4, offset = 0x4, fixed_abs, tag = 'smem constant byte address 0x4 - core index']
  #allocation1 [shape = 'u32[144,128]{1,0:T(1,128)}', space=vmem, size = 0x12000, scoped, tag = 'internal scratch']
  %s0 = inlined_call_operand.hbm [shape: f32[32,32], index: 0, kind: input, shape index: {}]
  %s1 = inlined_call_operand.hbm [shape: f32[32,32], index: 1, kind: input, shape index: {}]
  %s2 = inlined_call_operand.vmem [shape: f32[1,32], index: 2, kind: input, shape index: {}]
  %s3 = inlined_call_operand.hbm [shape: f32[32,96], index: 3, kind: input, shape index: {}]
  %s4 = inlined_call_operand.vmem [shape: f32[1,96], index: 4, kind: input, shape index: {}]
  %s5 = inlined_call_operand.vmem [shape: f32[32,96], index: 5, kind: output, shape index: {}]
  %s6 = sld [smem:[#allocation0]]
  $region42: #{feature_extractor.2} parent=0
    _
  %s8 = ssub.s32 1, %s6
  %s9 = scalar_select 0, %s8, %s6
  $region1: #{feature_extractor.2} parent=0
    #allocation2 [shape = 'u8[16384]{0}', space=vmem, size = 0x4000, scoped, tag = 'input window, operand 0, single buffered']
    #allocation3 [shape = 's32[1]{0}', space=sflag, size = 0x4, scoped, tag = 'scoped memory for feature_extractor.2']
    #allocation4 [shape = 'u8[16384]{0}', space=vmem, size = 0x4000, scoped, tag = 'input window, operand 1, single buffered']
    #allocation5 [shape = 's32[1]{0}', space=sflag, size = 0x4, scoped, tag = 'scoped memory for feature_extractor.2']
    #allocation6 [shape = 'u8[16384]{0}', space=vmem, size = 0x4000, scoped, tag = 'input window, operand 3, single buffered']
    %10 = vsyncpa [#allocation3], 0
    %11 = vsyncpa [#allocation5], 0
    // Predicated region
    $region2: #{feature_extractor.2} parent=1 // pred_check
      _
    $region3: #{feature_extractor.2} parent=1 // pred_check_branch
      %13 = sbr.rel (0) target = $region5
    $region4: #{feature_extractor.2} parent=1 // pred_region
      %s15 = ssub.s32 512, 512
      %16 = vsyncadd [#allocation3], %s15
      %s17 = sshll.u32 [#allocation2], 4
      %s18 = int_to_ptr.vmem [resolvable:$true] %s17
      %23 = dma.hbm_to_vmem [thread:$0]  %s0, 512, %s18, [#allocation3], 128, 128, 8
    $region5: #{feature_extractor.2} parent=1 // pred_fallthru
      _
    // Predicated region
    $region6: #{feature_extractor.2} parent=1 // pred_check
      _
    $region7: #{feature_extractor.2} parent=1 // pred_check_branch
      %25 = sbr.rel (0) target = $region9
    $region8: #{feature_extractor.2} parent=1 // pred_region
      %s27 = ssub.s32 512, 512
      %28 = vsyncadd [#allocation5], %s27
      %s29 = sshll.u32 [#allocation4], 4
      %s30 = int_to_ptr.vmem [resolvable:$true] %s29
      %35 = dma.hbm_to_vmem [thread:$0]  %s1, 512, %s30, [#allocation5], 128, 128, 8
    $region9: #{feature_extractor.2} parent=1 // pred_fallthru
      _
    // Predicated region
    $region10: #{feature_extractor.2} parent=1 // pred_check
      _
    $region11: #{feature_extractor.2} parent=1 // pred_check_branch
      %37 = sbr.rel (0) target = $region13
    $region12: #{feature_extractor.2} parent=1 // pred_region
      _
    $region13: #{feature_extractor.2} parent=1 // pred_fallthru
      _
    // Predicated region
    $region14: #{feature_extractor.2} parent=1 // pred_check
      _
    $region15: #{feature_extractor.2} parent=1 // pred_check_branch
      %39 = sbr.rel (0) target = $region17
    $region16: #{feature_extractor.2} parent=1 // pred_region
      %s41 = ssub.s32 512, 512
      %42 = vsyncadd [#allocation5], %s41
      %s43 = sshll.u32 [#allocation6], 4
      %s44 = int_to_ptr.vmem [resolvable:$true] %s43
      %49 = dma.hbm_to_vmem [thread:$0]  %s3, 512, %s44, [#allocation5], 128, 128, 8
    $region17: #{feature_extractor.2} parent=1 // pred_fallthru
      _
    // Predicated region
    $region18: #{feature_extractor.2} parent=1 // pred_check
      _
    $region19: #{feature_extractor.2} parent=1 // pred_check_branch
      %51 = sbr.rel (0) target = $region21
    $region20: #{feature_extractor.2} parent=1 // pred_region
      _
    $region21: #{feature_extractor.2} parent=1 // pred_fallthru
      _
    // Predicated region
    $region22: #{feature_extractor.2} parent=1 // pred_check
      _
    $region23: #{feature_extractor.2} parent=1 // pred_check_branch
      %53 = sbr.rel (0) target = $region25
    $region24: #{feature_extractor.2} parent=1 // pred_region
      %54 = dma.done [#allocation3], 512
    $region25: #{feature_extractor.2} parent=1 // pred_fallthru
      _
    // Predicated region
    $region26: #{feature_extractor.2} parent=1 // pred_check
      _
    $region27: #{feature_extractor.2} parent=1 // pred_check_branch
      %56 = sbr.rel (0) target = $region29
    $region28: #{feature_extractor.2} parent=1 // pred_region
      %57 = dma.done [#allocation5], 512
    $region29: #{feature_extractor.2} parent=1 // pred_fallthru
      _
    // Predicated region
    $region30: #{feature_extractor.2} parent=1 // pred_check
      _
    $region31: #{feature_extractor.2} parent=1 // pred_check_branch
      %59 = sbr.rel (0) target = $region33
    $region32: #{feature_extractor.2} parent=1 // pred_region
      %60 = dma.done [#allocation5], 512
    $region33: #{feature_extractor.2} parent=1 // pred_fallthru
      _
    %v61 = vld [vmem:[#allocation2] sm:$0xff]
    %v62 = vld [vmem:[#allocation2 + $0x8] sm:$0xff]
    %v63 = vld [vmem:[#allocation2 + $0x10] sm:$0xff]
    %v64 = vld [vmem:[#allocation2 + $0x18] sm:$0xff]
    %v65 = vld [vmem:[#allocation4] sm:$0xff]
    %v66 = vld [vmem:[#allocation4 + $0x8] sm:$0xff]
    %v67 = vld [vmem:[#allocation4 + $0x10] sm:$0xff]
    %v68 = vld [vmem:[#allocation4 + $0x18] sm:$0xff]
    %v69 = vld [vmem:[%s2] sm:$0x1]
    %v71 = vlaneseq
    %v72 = vshrl.u32 %v71, 7
    %v73 = vsub.s32 0, %v72
    %v74 = vrot.slane %v69, %v73
    %vm76 = vcmask 261120
    %v78 = vsel %vm76, %v61, 0
    %v81 = vsel %vm76, %v62, 0
    %v84 = vsel %vm76, %v63, 0
    %v87 = vsel %vm76, %v64, 0
    %89 = vmatprep.subr.mxu0 0.0
    %90 = vmatpush1.msra.mxu0 %v65
    %91 = vmatprep.subr.mxu0 0.0
    %92 = vmatpush1.msra.mxu0 %v66
    %93 = vmatprep.subr.mxu0 0.0
    %94 = vmatpush1.msra.mxu0 %v67
    %95 = vmatprep.subr.mxu0 0.0
    %96 = vmatpush1.msra.mxu0 %v68
    %97 = vmatprep.subr.mxu0 0.0
    %98 = vmatpush1.msra.mxu0 0.0
    %99 = vmatprep.subr.mxu0 0.0
    %100 = vmatpush1.msra.mxu0 0.0
    %101 = vmatprep.subr.mxu0 0.0
    %102 = vmatpush1.msra.mxu0 0.0
    %103 = vmatprep.subr.mxu0 0.0
    %104 = vmatpush1.msra.mxu0 0.0
    %105 = vmatprep.subr.mxu0 0.0
    %106 = vmatpush1.msra.mxu0 0.0
    %107 = vmatprep.subr.mxu0 0.0
    %108 = vmatpush1.msra.mxu0 0.0
    %109 = vmatprep.subr.mxu0 0.0
    %110 = vmatpush1.msra.mxu0 0.0
    %111 = vmatprep.subr.mxu0 0.0
    %112 = vmatpush1.msra.mxu0 0.0
    %113 = vmatprep.subr.mxu0 0.0
    %114 = vmatpush1.msra.mxu0 0.0
    %115 = vmatprep.subr.mxu0 0.0
    %116 = vmatpush1.msra.mxu0 0.0
    %117 = vmatprep.subr.mxu0 0.0
    %118 = vmatpush1.msra.mxu0 0.0
    %119 = vmatprep.subr.mxu0 0.0
    %120 = vmatpush1.msra.mxu0 0.0
    %121 = vmatprep.subr.mxu0 0.0
    %122 = vmatpush1.msra.mxu0 0.0
    %123 = vmatprep.subr.mxu0 0.0
    %124 = vmatpush1.msra.mxu0 0.0
    %125 = vmatprep.subr.mxu0 0.0
    %126 = vmatpush1.msra.mxu0 0.0
    %127 = vmatprep.subr.mxu0 0.0
    %128 = vmatpush1.msra.mxu0 0.0
    %129 = vmatprep.subr.mxu0 0.0
    %130 = vmatpush1.msra.mxu0 0.0
    %131 = vmatprep.subr.mxu0 0.0
    %132 = vmatpush1.msra.mxu0 0.0
    %133 = vmatprep.subr.mxu0 0.0
    %134 = vmatpush1.msra.mxu0 0.0
    %135 = vmatprep.subr.mxu0 0.0
    %136 = vmatpush1.msra.mxu0 0.0
    %137 = vmatprep.subr.mxu0 0.0
    %138 = vmatpush1.msra.mxu0 0.0
    %139 = vmatprep.subr.mxu0 0.0
    %140 = vmatpush1.msra.mxu0 0.0
    %141 = vmatprep.subr.mxu0 0.0
    %142 = vmatpush1.msra.mxu0 0.0
    %143 = vmatprep.subr.mxu0 0.0
    %144 = vmatpush1.msra.mxu0 0.0
    %145 = vmatprep.subr.mxu0 0.0
    %146 = vmatpush1.msra.mxu0 0.0
    %147 = vmatprep.subr.mxu0 0.0
    %148 = vmatpush1.msra.mxu0 0.0
    %149 = vmatprep.subr.mxu0 0.0
    %150 = vmatpush1.msra.mxu0 0.0
    %151 = vmatprep.subr.mxu0 0.0
    %152 = vmatpush1.msra.mxu0 0.0
    %153 = vmatprep.mubr.f32.mxu0 0.0
    %154 = vmatmul.mubr.f32.gmra.mrb[0].mxu0 %v78
    %v155 = vpop.f32.mrb[0].mxu0
    %v156 = vadd.f32 %v74, %v155
    %v157 = vpop.f32.mrb[0].mxu0
    %158 = vmatprep.mubr.f32.mxu0 0.0
    %159 = vmatmul.mubr.f32.gmra.mrb[0].mxu0 %v81
    %v160 = vpop.f32.mrb[0].mxu0
    %v161 = vadd.f32 %v74, %v160
    %v162 = vpop.f32.mrb[0].mxu0
    %163 = vmatprep.mubr.f32.mxu0 0.0
    %164 = vmatmul.mubr.f32.gmra.mrb[0].mxu0 %v84
    %v165 = vpop.f32.mrb[0].mxu0
    %v166 = vadd.f32 %v74, %v165
    %v167 = vpop.f32.mrb[0].mxu0
    %168 = vmatprep.mubr.f32.mxu0 0.0
    %169 = vmatmul.mubr.f32.gmra.mrb[0].mxu0 %v87
    %v170 = vpop.f32.mrb[0].mxu0
    %v171 = vadd.f32 %v74, %v170
    %v172 = vpop.f32.mrb[0].mxu0
    %173 = vdwg.mxu0
    %vm174 = vcmp.ge.f32.partialorder %v156, 0.0
    %vm175 = vcmp.ge.f32.partialorder %v161, 0.0
    %vm176 = vcmp.ge.f32.partialorder %v166, 0.0
    %vm177 = vcmp.ge.f32.partialorder %v171, 0.0
    %v178 = vmul.f32 %v156, 0.01
    %v179 = vmul.f32 %v161, 0.01
    %v180 = vmul.f32 %v166, 0.01
    %v181 = vmul.f32 %v171, 0.01
    %v182 = vsel %vm174, %v156, %v178
    %v183 = vsel %vm175, %v161, %v179
    %v184 = vsel %vm176, %v166, %v180
    %v185 = vsel %vm177, %v171, %v181
    %v186 = vld [vmem:[#allocation6] sm:$0xff]
    %v187 = vld [vmem:[#allocation6 + $0x8] sm:$0xff]
    %v188 = vld [vmem:[#allocation6 + $0x10] sm:$0xff]
    %v189 = vld [vmem:[#allocation6 + $0x18] sm:$0xff]
    %v190 = vld [vmem:[%s4] sm:$0x1]
    %v192 = vlaneseq
    %v193 = vshrl.u32 %v192, 7
    %v194 = vsub.s32 0, %v193
    %v195 = vrot.slane %v190, %v194
    %v198 = vsel %vm76, %v182, 0
    %v201 = vsel %vm76, %v183, 0
    %v204 = vsel %vm76, %v184, 0
    %v207 = vsel %vm76, %v185, 0
    %209 = vmatprep.subr.mxu0 0.0
    %210 = vmatpush1.msra.mxu0 %v186
    %211 = vmatprep.subr.mxu0 0.0
    %212 = vmatpush1.msra.mxu0 %v187
    %213 = vmatprep.subr.mxu0 0.0
    %214 = vmatpush1.msra.mxu0 %v188
    %215 = vmatprep.subr.mxu0 0.0
    %216 = vmatpush1.msra.mxu0 %v189
    %217 = vmatprep.subr.mxu0 0.0
    %218 = vmatpush1.msra.mxu0 0.0
    %219 = vmatprep.subr.mxu0 0.0
    %220 = vmatpush1.msra.mxu0 0.0
    %221 = vmatprep.subr.mxu0 0.0
    %222 = vmatpush1.msra.mxu0 0.0
    %223 = vmatprep.subr.mxu0 0.0
    %224 = vmatpush1.msra.mxu0 0.0
    %225 = vmatprep.subr.mxu0 0.0
    %226 = vmatpush1.msra.mxu0 0.0
    %227 = vmatprep.subr.mxu0 0.0
    %228 = vmatpush1.msra.mxu0 0.0
    %229 = vmatprep.subr.mxu0 0.0
    %230 = vmatpush1.msra.mxu0 0.0
    %231 = vmatprep.subr.mxu0 0.0
    %232 = vmatpush1.msra.mxu0 0.0
    %233 = vmatprep.subr.mxu0 0.0
    %234 = vmatpush1.msra.mxu0 0.0
    %235 = vmatprep.subr.mxu0 0.0
    %236 = vmatpush1.msra.mxu0 0.0
    %237 = vmatprep.subr.mxu0 0.0
    %238 = vmatpush1.msra.mxu0 0.0
    %239 = vmatprep.subr.mxu0 0.0
    %240 = vmatpush1.msra.mxu0 0.0
    %241 = vmatprep.subr.mxu0 0.0
    %242 = vmatpush1.msra.mxu0 0.0
    %243 = vmatprep.subr.mxu0 0.0
    %244 = vmatpush1.msra.mxu0 0.0
    %245 = vmatprep.subr.mxu0 0.0
    %246 = vmatpush1.msra.mxu0 0.0
    %247 = vmatprep.subr.mxu0 0.0
    %248 = vmatpush1.msra.mxu0 0.0
    %249 = vmatprep.subr.mxu0 0.0
    %250 = vmatpush1.msra.mxu0 0.0
    %251 = vmatprep.subr.mxu0 0.0
    %252 = vmatpush1.msra.mxu0 0.0
    %253 = vmatprep.subr.mxu0 0.0
    %254 = vmatpush1.msra.mxu0 0.0
    %255 = vmatprep.subr.mxu0 0.0
    %256 = vmatpush1.msra.mxu0 0.0
    %257 = vmatprep.subr.mxu0 0.0
    %258 = vmatpush1.msra.mxu0 0.0
    %259 = vmatprep.subr.mxu0 0.0
    %260 = vmatpush1.msra.mxu0 0.0
    %261 = vmatprep.subr.mxu0 0.0
    %262 = vmatpush1.msra.mxu0 0.0
    %263 = vmatprep.subr.mxu0 0.0
    %264 = vmatpush1.msra.mxu0 0.0
    %265 = vmatprep.subr.mxu0 0.0
    %266 = vmatpush1.msra.mxu0 0.0
    %267 = vmatprep.subr.mxu0 0.0
    %268 = vmatpush1.msra.mxu0 0.0
    %269 = vmatprep.subr.mxu0 0.0
    %270 = vmatpush1.msra.mxu0 0.0
    %271 = vmatprep.subr.mxu0 0.0
    %272 = vmatpush1.msra.mxu0 0.0
    %273 = vmatprep.mubr.f32.mxu0 0.0
    %274 = vmatmul.mubr.f32.gmra.mrb[0].mxu0 %v198
    %v275 = vpop.f32.mrb[0].mxu0
    %v276 = vadd.f32 %v195, %v275
    %v277 = vpop.f32.mrb[0].mxu0
    %278 = vmatprep.mubr.f32.mxu0 0.0
    %279 = vmatmul.mubr.f32.gmra.mrb[0].mxu0 %v201
    %v280 = vpop.f32.mrb[0].mxu0
    %v281 = vadd.f32 %v195, %v280
    %v282 = vpop.f32.mrb[0].mxu0
    %283 = vmatprep.mubr.f32.mxu0 0.0
    %284 = vmatmul.mubr.f32.gmra.mrb[0].mxu0 %v204
    %v285 = vpop.f32.mrb[0].mxu0
    %v286 = vadd.f32 %v195, %v285
    %v287 = vpop.f32.mrb[0].mxu0
    %288 = vmatprep.mubr.f32.mxu0 0.0
    %289 = vmatmul.mubr.f32.gmra.mrb[0].mxu0 %v207
    %v290 = vpop.f32.mrb[0].mxu0
    %v291 = vadd.f32 %v195, %v290
    %v292 = vpop.f32.mrb[0].mxu0
    %293 = vdwg.mxu0
    %vm294 = vcmask 785408
    %295 = vst.msk [vmem:[%s5] sm:$0xff] %vm294, %v276
    %296 = vst.msk [vmem:[%s5 + $0x8] sm:$0xff] %vm294, %v281
    %297 = vst.msk [vmem:[%s5 + $0x10] sm:$0xff] %vm294, %v286
    %298 = vst.msk [vmem:[%s5 + $0x18] sm:$0xff] %vm294, %v291
    // Predicated region
    $region34: #{feature_extractor.2} parent=1 // pred_check
      _
    $region35: #{feature_extractor.2} parent=1 // pred_check_branch
      %300 = sbr.rel (0) target = $region37
    $region36: #{feature_extractor.2} parent=1 // pred_region
      _
    $region37: #{feature_extractor.2} parent=1 // pred_fallthru
      _
    // Predicated region
    $region38: #{feature_extractor.2} parent=1 // pred_check
      _
    $region39: #{feature_extractor.2} parent=1 // pred_check_branch
      %302 = sbr.rel (0) target = $region41
    $region40: #{feature_extractor.2} parent=1 // pred_region
      _
    $region41: #{feature_extractor.2} parent=1 // pred_fallthru
      _
    %303 = vsyncpa [#allocation3], 1
    %304 = vsyncpa [#allocation5], 1

// kernel: feature_extractor.3
$region0: #{feature_extractor.3}
  #allocation0 [shape = 'u32[]', space=smem, size = 0x4, offset = 0x4, fixed_abs, tag = 'smem constant byte address 0x4 - core index']
  #allocation1 [shape = 'u32[144,128]{1,0:T(1,128)}', space=vmem, size = 0x12000, scoped, tag = 'internal scratch']
  %s0 = inlined_call_operand.vmem [shape: f32[4,8,96], index: 0, kind: input, shape index: {}]
  %s1 = inlined_call_operand.vmem [shape: f32[32,96], index: 1, kind: input, shape index: {}]
  %s2 = inlined_call_operand.vmem [shape: f32[1,32], index: 2, kind: input, shape index: {}]
  %s3 = inlined_call_operand.hbm [shape: f32[4,32], index: 3, kind: output, shape index: {}]
  %s4 = sld [smem:[#allocation0]]
  $region26: #{feature_extractor.3} parent=0
    _
  %s6 = ssub.s32 1, %s4
  %s7 = scalar_select 0, %s6, %s4
  $region1: #{feature_extractor.3} parent=0
    #allocation2 [shape = 'u8[2048]{0}', space=vmem, size = 0x800, scoped, tag = 'output window, operand 0, single buffered']
    #allocation3 [shape = 's32[1]{0}', space=sflag, size = 0x4, scoped, tag = 'scoped memory for feature_extractor.3']
    %8 = vsyncpa [#allocation3], 0
    // Predicated region
    $region2: #{feature_extractor.3} parent=1 // pred_check
      _
    $region3: #{feature_extractor.3} parent=1 // pred_check_branch
      %10 = sbr.rel (0) target = $region5
    $region4: #{feature_extractor.3} parent=1 // pred_region
      _
    $region5: #{feature_extractor.3} parent=1 // pred_fallthru
      _
    // Predicated region
    $region6: #{feature_extractor.3} parent=1 // pred_check
      _
    $region7: #{feature_extractor.3} parent=1 // pred_check_branch
      %12 = sbr.rel (0) target = $region9
    $region8: #{feature_extractor.3} parent=1 // pred_region
      _
    $region9: #{feature_extractor.3} parent=1 // pred_fallthru
      _
    // Predicated region
    $region10: #{feature_extractor.3} parent=1 // pred_check
      _
    $region11: #{feature_extractor.3} parent=1 // pred_check_branch
      %14 = sbr.rel (0) target = $region13
    $region12: #{feature_extractor.3} parent=1 // pred_region
      _
    $region13: #{feature_extractor.3} parent=1 // pred_fallthru
      _
    %p15 = scmp.eq.s32.totalorder 0, 0
    // Predicated region
    $region14: #{feature_extractor.3} parent=1 // pred_check
      %p16 = pneg %p15
    $region15: #{feature_extractor.3} parent=1 // pred_check_branch
      %18 = sbr.rel (%p16) target = $region17
    $region16: #{feature_extractor.3} parent=1 // pred_region
      %vm19 = vcmask 257024
      %20 = vst.msk [vmem:[#allocation2] sm:$0xf] %vm19, 0.0
    $region17: #{feature_extractor.3} parent=1 // pred_fallthru
      _
    %v21 = vld [vmem:[#allocation2] sm:$0xf]
    %v22 = vld [vmem:[%s1] sm:$0xff]
    %v23 = vld [vmem:[%s1 + $0x8] sm:$0xff]
    %v24 = vld [vmem:[%s1 + $0x10] sm:$0xff]
    %v25 = vld [vmem:[%s1 + $0x18] sm:$0xff]
    %v26 = vld [vmem:[%s2] sm:$0x1]
    %v27 = vld [vmem:[%s0] sm:$0x1]
    %v28 = vld [vmem:[%s0 + $0x8] sm:$0x1]
    %v29 = vld [vmem:[%s0 + $0x10] sm:$0x1]
    %v30 = vld [vmem:[%s0 + $0x18] sm:$0x1]
    %vm31 = vcmask 261120
    %v33 = vsel %vm31, %v21, 0
    %35 = vmatprep.subr.mxu0 0.0
    %36 = vmatpush1.msra.mxu0 %v22
    %37 = vmatprep.subr.mxu0 0.0
    %38 = vmatpush1.msra.mxu0 %v23
    %39 = vmatprep.subr.mxu0 0.0
    %40 = vmatpush1.msra.mxu0 %v24
    %41 = vmatprep.subr.mxu0 0.0
    %42 = vmatpush1.msra.mxu0 %v25
    %43 = vmatprep.subr.mxu0 0.0
    %44 = vmatpush1.msra.mxu0 0.0
    %45 = vmatprep.subr.mxu0 0.0
    %46 = vmatpush1.msra.mxu0 0.0
    %47 = vmatprep.subr.mxu0 0.0
    %48 = vmatpush1.msra.mxu0 0.0
    %49 = vmatprep.subr.mxu0 0.0
    %50 = vmatpush1.msra.mxu0 0.0
    %51 = vmatprep.subr.mxu0 0.0
    %52 = vmatpush1.msra.mxu0 0.0
    %53 = vmatprep.subr.mxu0 0.0
    %54 = vmatpush1.msra.mxu0 0.0
    %55 = vmatprep.subr.mxu0 0.0
    %56 = vmatpush1.msra.mxu0 0.0
    %57 = vmatprep.subr.mxu0 0.0
    %58 = vmatpush1.msra.mxu0 0.0
    %59 = vmatprep.subr.mxu0 0.0
    %60 = vmatpush1.msra.mxu0 0.0
    %61 = vmatprep.subr.mxu0 0.0
    %62 = vmatpush1.msra.mxu0 0.0
    %63 = vmatprep.subr.mxu0 0.0
    %64 = vmatpush1.msra.mxu0 0.0
    %65 = vmatprep.subr.mxu0 0.0
    %66 = vmatpush1.msra.mxu0 0.0
    %67 = vmatprep.subr.mxu0 0.0
    %68 = vmatpush1.msra.mxu0 0.0
    %69 = vmatprep.subr.mxu0 0.0
    %70 = vmatpush1.msra.mxu0 0.0
    %71 = vmatprep.subr.mxu0 0.0
    %72 = vmatpush1.msra.mxu0 0.0
    %73 = vmatprep.subr.mxu0 0.0
    %74 = vmatpush1.msra.mxu0 0.0
    %75 = vmatprep.subr.mxu0 0.0
    %76 = vmatpush1.msra.mxu0 0.0
    %77 = vmatprep.subr.mxu0 0.0
    %78 = vmatpush1.msra.mxu0 0.0
    %79 = vmatprep.subr.mxu0 0.0
    %80 = vmatpush1.msra.mxu0 0.0
    %81 = vmatprep.subr.mxu0 0.0
    %82 = vmatpush1.msra.mxu0 0.0
    %83 = vmatprep.subr.mxu0 0.0
    %84 = vmatpush1.msra.mxu0 0.0
    %85 = vmatprep.subr.mxu0 0.0
    %86 = vmatpush1.msra.mxu0 0.0
    %87 = vmatprep.subr.mxu0 0.0
    %88 = vmatpush1.msra.mxu0 0.0
    %89 = vmatprep.subr.mxu0 0.0
    %90 = vmatpush1.msra.mxu0 0.0
    %91 = vmatprep.subr.mxu0 0.0
    %92 = vmatpush1.msra.mxu0 0.0
    %93 = vmatprep.subr.mxu0 0.0
    %94 = vmatpush1.msra.mxu0 0.0
    %95 = vmatprep.subr.mxu0 0.0
    %96 = vmatpush1.msra.mxu0 0.0
    %97 = vmatprep.subr.mxu0 0.0
    %98 = vmatpush1.msra.mxu0 0.0
    %99 = vmatprep.mubr.f32.mxu0 0.0
    %100 = vmatmul.mubr.f32.gmra.mrb[0].mxu0 %v33
    %v101 = vpop.f32.mrb[0].mxu0
    %v102 = vadd.f32 0.0, %v101
    %v103 = vpop.f32.mrb[0].mxu0
    %104 = vdwg.mxu0
    %v106 = vrot.slane %v102, 1
    %v107 = vrot.slane %v102, 2
    %v108 = vrot.slane %v102, 3
    %v113 = vadd.f32 %v27, %v102
    %v114 = vadd.f32 %v28, %v106
    %v115 = vadd.f32 %v29, %v107
    %v116 = vadd.f32 %v30, %v108
    %v117 = vxor.u32 %v113, 2147483648
    %v118 = vxor.u32 %v114, 2147483648
    %v119 = vxor.u32 %v115, 2147483648
    %v120 = vxor.u32 %v116, 2147483648
    %v121 = vmul.f32 %v117, 1.442695
    %v122 = vpow.pop %v121
    %v123 = vmul.f32 %v118, 1.442695
    %v124 = vpow.pop %v123
    %v125 = vmul.f32 %v119, 1.442695
    %v126 = vpow.pop %v125
    %v127 = vmul.f32 %v120, 1.442695
    %v128 = vpow.pop %v127
    %v129 = vadd.f32 %v122, 1.0
    %v130 = vadd.f32 %v124, 1.0
    %v131 = vadd.f32 %v126, 1.0
    %v132 = vadd.f32 %v128, 1.0
    %v133 = vrcp.pop %v129
    %v134 = vmul.f32 1.0, %v133
    %v135 = vrcp.pop %v130
    %v136 = vmul.f32 1.0, %v135
    %v137 = vrcp.pop %v131
    %v138 = vmul.f32 1.0, %v137
    %v139 = vrcp.pop %v132
    %v140 = vmul.f32 1.0, %v139
    %v142 = vlaneseq
    %v143 = vshrl.u32 %v142, 7
    %v144 = vsub.s32 0, %v143
    %v145 = vrot.slane %v26, %v144
    %146 = vrot.lane.b32.xlu0 %v145, 64
    %v147 = vpop.permute.xlu0 %146
    %v149 = vadd.f32 %v102, %v147
    %v151 = vrot.slane %v149, 1
    %v152 = vrot.slane %v149, 2
    %v153 = vrot.slane %v149, 3
    %154 = vrot.lane.b32.xlu0 %v149, 64
    %v155 = vpop.permute.xlu0 %154
    %156 = vrot.lane.b32.xlu0 %v151, 64
    %v157 = vpop.permute.xlu0 %156
    %158 = vrot.lane.b32.xlu0 %v152, 64
    %v159 = vpop.permute.xlu0 %158
    %160 = vrot.lane.b32.xlu0 %v153, 64
    %v161 = vpop.permute.xlu0 %160
    %v166 = vmul.f32 %v134, %v155
    %v167 = vmul.f32 %v136, %v157
    %v168 = vmul.f32 %v138, %v159
    %v169 = vmul.f32 %v140, %v161
    %174 = vrot.lane.b32.xlu0 %v166, 64
    %v175 = vpop.permute.xlu0 %174
    %176 = vrot.lane.b32.xlu0 %v167, 64
    %v177 = vpop.permute.xlu0 %176
    %178 = vrot.lane.b32.xlu0 %v168, 64
    %v179 = vpop.permute.xlu0 %178
    %180 = vrot.lane.b32.xlu0 %v169, 64
    %v181 = vpop.permute.xlu0 %180
    %v186 = vadd.f32 %v27, %v175
    %v187 = vadd.f32 %v28, %v177
    %v188 = vadd.f32 %v29, %v179
    %v189 = vadd.f32 %v30, %v181
    %v190 = vtanh.pop %v186
    %v191 = vtanh.pop %v187
    %v192 = vtanh.pop %v188
    %v193 = vtanh.pop %v189
    %v198 = vrot.slane %v191, 7
    %vm199 = vcmask 1041409
    %v200 = vsel %vm199, %v198, %v190
    %v201 = vrot.slane %v192, 6
    %vm202 = vcmask 1042434
    %v203 = vsel %vm202, %v201, %v200
    %v204 = vrot.slane %v193, 5
    %vm205 = vcmask 1043459
    %v206 = vsel %vm205, %v204, %v203
    %207 = vrot.lane.b32.xlu0 %v206, 64
    %v208 = vpop.permute.xlu0 %207
    %v210 = vsub.f32 %v21, %v208
    %v212 = vrot.slane %v210, 1
    %v213 = vrot.slane %v210, 2
    %v214 = vrot.slane %v210, 3
    %215 = vrot.lane.b32.xlu0 %v210, 32
    %v216 = vpop.permute.xlu0 %215
    %217 = vrot.lane.b32.xlu0 %v212, 32
    %v218 = vpop.permute.xlu0 %217
    %219 = vrot.lane.b32.xlu0 %v213, 32
    %v220 = vpop.permute.xlu0 %219
    %221 = vrot.lane.b32.xlu0 %v214, 32
    %v222 = vpop.permute.xlu0 %221
    %v227 = vmul.f32 %v134, %v216
    %v228 = vmul.f32 %v136, %v218
    %v229 = vmul.f32 %v138, %v220
    %v230 = vmul.f32 %v140, %v222
    %235 = vrot.lane.b32.xlu0 %v227, 32
    %v236 = vpop.permute.xlu0 %235
    %237 = vrot.lane.b32.xlu0 %v228, 32
    %v238 = vpop.permute.xlu0 %237
    %239 = vrot.lane.b32.xlu0 %v229, 32
    %v240 = vpop.permute.xlu0 %239
    %241 = vrot.lane.b32.xlu0 %v230, 32
    %v242 = vpop.permute.xlu0 %241
    %v247 = vadd.f32 %v190, %v236
    %v248 = vadd.f32 %v191, %v238
    %v249 = vadd.f32 %v192, %v240
    %v250 = vadd.f32 %v193, %v242
    %v251 = vld [vmem:[%s0 + $0x1] sm:$0x1]
    %v252 = vld [vmem:[%s0 + $0x9] sm:$0x1]
    %v253 = vld [vmem:[%s0 + $0x11] sm:$0x1]
    %v254 = vld [vmem:[%s0 + $0x19] sm:$0x1]
    %v259 = vrot.slane %v248, 7
    %v260 = vsel %vm199, %v259, %v247
    %v261 = vrot.slane %v249, 6
    %v262 = vsel %vm202, %v261, %v260
    %v263 = vrot.slane %v250, 5
    %v264 = vsel %vm205, %v263, %v262
    %265 = vrot.lane.b32.xlu0 %v264, 64
    %v266 = vpop.permute.xlu0 %265
    %v267 = vsel %vm31, %v266, 0
    %269 = vmatprep.subr.mxu0 0.0
    %270 = vmatpush1.msra.mxu0 %v22
    %271 = vmatprep.subr.mxu0 0.0
    %272 = vmatpush1.msra.mxu0 %v23
    %273 = vmatprep.subr.mxu0 0.0
    %274 = vmatpush1.msra.mxu0 %v24
    %275 = vmatprep.subr.mxu0 0.0
    %276 = vmatpush1.msra.mxu0 %v25
    %277 = vmatprep.subr.mxu0 0.0
    %278 = vmatpush1.msra.mxu0 0.0
    %279 = vmatprep.subr.mxu0 0.0
    %280 = vmatpush1.msra.mxu0 0.0
    %281 = vmatprep.subr.mxu0 0.0
    %282 = vmatpush1.msra.mxu0 0.0
    %283 = vmatprep.subr.mxu0 0.0
    %284 = vmatpush1.msra.mxu0 0.0
    %285 = vmatprep.subr.mxu0 0.0
    %286 = vmatpush1.msra.mxu0 0.0
    %287 = vmatprep.subr.mxu0 0.0
    %288 = vmatpush1.msra.mxu0 0.0
    %289 = vmatprep.subr.mxu0 0.0
    %290 = vmatpush1.msra.mxu0 0.0
    %291 = vmatprep.subr.mxu0 0.0
    %292 = vmatpush1.msra.mxu0 0.0
    %293 = vmatprep.subr.mxu0 0.0
    %294 = vmatpush1.msra.mxu0 0.0
    %295 = vmatprep.subr.mxu0 0.0
    %296 = vmatpush1.msra.mxu0 0.0
    %297 = vmatprep.subr.mxu0 0.0
    %298 = vmatpush1.msra.mxu0 0.0
    %299 = vmatprep.subr.mxu0 0.0
    %300 = vmatpush1.msra.mxu0 0.0
    %301 = vmatprep.subr.mxu0 0.0
    %302 = vmatpush1.msra.mxu0 0.0
    %303 = vmatprep.subr.mxu0 0.0
    %304 = vmatpush1.msra.mxu0 0.0
    %305 = vmatprep.subr.mxu0 0.0
    %306 = vmatpush1.msra.mxu0 0.0
    %307 = vmatprep.subr.mxu0 0.0
    %308 = vmatpush1.msra.mxu0 0.0
    %309 = vmatprep.subr.mxu0 0.0
    %310 = vmatpush1.msra.mxu0 0.0
    %311 = vmatprep.subr.mxu0 0.0
    %312 = vmatpush1.msra.mxu0 0.0
    %313 = vmatprep.subr.mxu0 0.0
    %314 = vmatpush1.msra.mxu0 0.0
    %315 = vmatprep.subr.mxu0 0.0
    %316 = vmatpush1.msra.mxu0 0.0
    %317 = vmatprep.subr.mxu0 0.0
    %318 = vmatpush1.msra.mxu0 0.0
    %319 = vmatprep.subr.mxu0 0.0
    %320 = vmatpush1.msra.mxu0 0.0
    %321 = vmatprep.subr.mxu0 0.0
    %322 = vmatpush1.msra.mxu0 0.0
    %323 = vmatprep.subr.mxu0 0.0
    %324 = vmatpush1.msra.mxu0 0.0
    %325 = vmatprep.subr.mxu0 0.0
    %326 = vmatpush1.msra.mxu0 0.0
    %327 = vmatprep.subr.mxu0 0.0
    %328 = vmatpush1.msra.mxu0 0.0
    %329 = vmatprep.subr.mxu0 0.0
    %330 = vmatpush1.msra.mxu0 0.0
    %331 = vmatprep.subr.mxu0 0.0
    %332 = vmatpush1.msra.mxu0 0.0
    %333 = vmatprep.mubr.f32.mxu0 0.0
    %334 = vmatmul.mubr.f32.gmra.mrb[0].mxu0 %v267
    %v335 = vpop.f32.mrb[0].mxu0
    %v336 = vadd.f32 0.0, %v335
    %v337 = vpop.f32.mrb[0].mxu0
    %338 = vdwg.mxu0
    %v340 = vrot.slane %v336, 1
    %v341 = vrot.slane %v336, 2
    %v342 = vrot.slane %v336, 3
    %v347 = vadd.f32 %v251, %v336
    %v348 = vadd.f32 %v252, %v340
    %v349 = vadd.f32 %v253, %v341
    %v350 = vadd.f32 %v254, %v342
    %v351 = vxor.u32 %v347, 2147483648
    %v352 = vxor.u32 %v348, 2147483648
    %v353 = vxor.u32 %v349, 2147483648
    %v354 = vxor.u32 %v350, 2147483648
    %v355 = vmul.f32 %v351, 1.442695
    %v356 = vpow.pop %v355
    %v357 = vmul.f32 %v352, 1.442695
    %v358 = vpow.pop %v357
    %v359 = vmul.f32 %v353, 1.442695
    %v360 = vpow.pop %v359
    %v361 = vmul.f32 %v354, 1.442695
    %v362 = vpow.pop %v361
    %v363 = vadd.f32 %v356, 1.0
    %v364 = vadd.f32 %v358, 1.0
    %v365 = vadd.f32 %v360, 1.0
    %v366 = vadd.f32 %v362, 1.0
    %v367 = vrcp.pop %v363
    %v368 = vmul.f32 1.0, %v367
    %v369 = vrcp.pop %v364
    %v370 = vmul.f32 1.0, %v369
    %v371 = vrcp.pop %v365
    %v372 = vmul.f32 1.0, %v371
    %v373 = vrcp.pop %v366
    %v374 = vmul.f32 1.0, %v373
    %v375 = vadd.f32 %v336, %v147
    %v377 = vrot.slane %v375, 1
    %v378 = vrot.slane %v375, 2
    %v379 = vrot.slane %v375, 3
    %380 = vrot.lane.b32.xlu0 %v375, 64
    %v381 = vpop.permute.xlu0 %380
    %382 = vrot.lane.b32.xlu0 %v377, 64
    %v383 = vpop.permute.xlu0 %382
    %384 = vrot.lane.b32.xlu0 %v378, 64
    %v385 = vpop.permute.xlu0 %384
    %386 = vrot.lane.b32.xlu0 %v379, 64
    %v387 = vpop.permute.xlu0 %386
    %v392 = vmul.f32 %v368, %v381
    %v393 = vmul.f32 %v370, %v383
    %v394 = vmul.f32 %v372, %v385
    %v395 = vmul.f32 %v374, %v387
    %400 = vrot.lane.b32.xlu0 %v392, 64
    %v401 = vpop.permute.xlu0 %400
    %402 = vrot.lane.b32.xlu0 %v393, 64
    %v403 = vpop.permute.xlu0 %402
    %404 = vrot.lane.b32.xlu0 %v394, 64
    %v405 = vpop.permute.xlu0 %404
    %406 = vrot.lane.b32.xlu0 %v395, 64
    %v407 = vpop.permute.xlu0 %406
    %v412 = vadd.f32 %v251, %v401
    %v413 = vadd.f32 %v252, %v403
    %v414 = vadd.f32 %v253, %v405
    %v415 = vadd.f32 %v254, %v407
    %v416 = vtanh.pop %v412
    %v417 = vtanh.pop %v413
    %v418 = vtanh.pop %v414
    %v419 = vtanh.pop %v415
    %v420 = vsub.f32 %v247, %v416
    %v421 = vsub.f32 %v248, %v417
    %v422 = vsub.f32 %v249, %v418
    %v423 = vsub.f32 %v250, %v419
    %428 = vrot.lane.b32.xlu0 %v420, 96
    %v429 = vpop.permute.xlu0 %428
    %430 = vrot.lane.b32.xlu0 %v421, 96
    %v431 = vpop.permute.xlu0 %430
    %432 = vrot.lane.b32.xlu0 %v422, 96
    %v433 = vpop.permute.xlu0 %432
    %434 = vrot.lane.b32.xlu0 %v423, 96
    %v435 = vpop.permute.xlu0 %434
    %v440 = vmul.f32 %v368, %v429
    %v441 = vmul.f32 %v370, %v431
    %v442 = vmul.f32 %v372, %v433
    %v443 = vmul.f32 %v374, %v435
    %448 = vrot.lane.b32.xlu0 %v440, 32
    %v449 = vpop.permute.xlu0 %448
    %450 = vrot.lane.b32.xlu0 %v441, 32
    %v451 = vpop.permute.xlu0 %450
    %452 = vrot.lane.b32.xlu0 %v442, 32
    %v453 = vpop.permute.xlu0 %452
    %454 = vrot.lane.b32.xlu0 %v443, 32
    %v455 = vpop.permute.xlu0 %454
    %v460 = vadd.f32 %v416, %v449
    %v461 = vadd.f32 %v417, %v451
    %v462 = vadd.f32 %v418, %v453
    %v463 = vadd.f32 %v419, %v455
    %v464 = vld [vmem:[%s0 + $0x2] sm:$0x1]
    %v465 = vld [vmem:[%s0 + $0xa] sm:$0x1]
    %v466 = vld [vmem:[%s0 + $0x12] sm:$0x1]
    %v467 = vld [vmem:[%s0 + $0x1a] sm:$0x1]
    %v472 = vrot.slane %v461, 7
    %v473 = vsel %vm199, %v472, %v460
    %v474 = vrot.slane %v462, 6
    %v475 = vsel %vm202, %v474, %v473
    %v476 = vrot.slane %v463, 5
    %v477 = vsel %vm205, %v476, %v475
    %478 = vrot.lane.b32.xlu0 %v477, 64
    %v479 = vpop.permute.xlu0 %478
    %v480 = vsel %vm31, %v479, 0
    %482 = vmatprep.subr.mxu0 0.0
    %483 = vmatpush1.msra.mxu0 %v22
    %484 = vmatprep.subr.mxu0 0.0
    %485 = vmatpush1.msra.mxu0 %v23
    %486 = vmatprep.subr.mxu0 0.0
    %487 = vmatpush1.msra.mxu0 %v24
    %488 = vmatprep.subr.mxu0 0.0
    %489 = vmatpush1.msra.mxu0 %v25
    %490 = vmatprep.subr.mxu0 0.0
    %491 = vmatpush1.msra.mxu0 0.0
    %492 = vmatprep.subr.mxu0 0.0
    %493 = vmatpush1.msra.mxu0 0.0
    %494 = vmatprep.subr.mxu0 0.0
    %495 = vmatpush1.msra.mxu0 0.0
    %496 = vmatprep.subr.mxu0 0.0
    %497 = vmatpush1.msra.mxu0 0.0
    %498 = vmatprep.subr.mxu0 0.0
    %499 = vmatpush1.msra.mxu0 0.0
    %500 = vmatprep.subr.mxu0 0.0
    %501 = vmatpush1.msra.mxu0 0.0
    %502 = vmatprep.subr.mxu0 0.0
    %503 = vmatpush1.msra.mxu0 0.0
    %504 = vmatprep.subr.mxu0 0.0
    %505 = vmatpush1.msra.mxu0 0.0
    %506 = vmatprep.subr.mxu0 0.0
    %507 = vmatpush1.msra.mxu0 0.0
    %508 = vmatprep.subr.mxu0 0.0
    %509 = vmatpush1.msra.mxu0 0.0
    %510 = vmatprep.subr.mxu0 0.0
    %511 = vmatpush1.msra.mxu0 0.0
    %512 = vmatprep.subr.mxu0 0.0
    %513 = vmatpush1.msra.mxu0 0.0
    %514 = vmatprep.subr.mxu0 0.0
    %515 = vmatpush1.msra.mxu0 0.0
    %516 = vmatprep.subr.mxu0 0.0
    %517 = vmatpush1.msra.mxu0 0.0
    %518 = vmatprep.subr.mxu0 0.0
    %519 = vmatpush1.msra.mxu0 0.0
    %520 = vmatprep.subr.mxu0 0.0
    %521 = vmatpush1.msra.mxu0 0.0
    %522 = vmatprep.subr.mxu0 0.0
    %523 = vmatpush1.msra.mxu0 0.0
    %524 = vmatprep.subr.mxu0 0.0
    %525 = vmatpush1.msra.mxu0 0.0
    %526 = vmatprep.subr.mxu0 0.0
    %527 = vmatpush1.msra.mxu0 0.0
    %528 = vmatprep.subr.mxu0 0.0
    %529 = vmatpush1.msra.mxu0 0.0
    %530 = vmatprep.subr.mxu0 0.0
    %531 = vmatpush1.msra.mxu0 0.0
    %532 = vmatprep.subr.mxu0 0.0
    %533 = vmatpush1.msra.mxu0 0.0
    %534 = vmatprep.subr.mxu0 0.0
    %535 = vmatpush1.msra.mxu0 0.0
    %536 = vmatprep.subr.mxu0 0.0
    %537 = vmatpush1.msra.mxu0 0.0
    %538 = vmatprep.subr.mxu0 0.0
    %539 = vmatpush1.msra.mxu0 0.0
    %540 = vmatprep.subr.mxu0 0.0
    %541 = vmatpush1.msra.mxu0 0.0
    %542 = vmatprep.subr.mxu0 0.0
    %543 = vmatpush1.msra.mxu0 0.0
    %544 = vmatprep.subr.mxu0 0.0
    %545 = vmatpush1.msra.mxu0 0.0
    %546 = vmatprep.mubr.f32.mxu0 0.0
    %547 = vmatmul.mubr.f32.gmra.mrb[0].mxu0 %v480
    %v548 = vpop.f32.mrb[0].mxu0
    %v549 = vadd.f32 0.0, %v548
    %v550 = vpop.f32.mrb[0].mxu0
    %551 = vdwg.mxu0
    %v553 = vrot.slane %v549, 1
    %v554 = vrot.slane %v549, 2
    %v555 = vrot.slane %v549, 3
    %v560 = vadd.f32 %v464, %v549
    %v561 = vadd.f32 %v465, %v553
    %v562 = vadd.f32 %v466, %v554
    %v563 = vadd.f32 %v467, %v555
    %v564 = vxor.u32 %v560, 2147483648
    %v565 = vxor.u32 %v561, 2147483648
    %v566 = vxor.u32 %v562, 2147483648
    %v567 = vxor.u32 %v563, 2147483648
    %v568 = vmul.f32 %v564, 1.442695
    %v569 = vpow.pop %v568
    %v570 = vmul.f32 %v565, 1.442695
    %v571 = vpow.pop %v570
    %v572 = vmul.f32 %v566, 1.442695
    %v573 = vpow.pop %v572
    %v574 = vmul.f32 %v567, 1.442695
    %v575 = vpow.pop %v574
    %v576 = vadd.f32 %v569, 1.0
    %v577 = vadd.f32 %v571, 1.0
    %v578 = vadd.f32 %v573, 1.0
    %v579 = vadd.f32 %v575, 1.0
    %v580 = vrcp.pop %v576
    %v581 = vmul.f32 1.0, %v580
    %v582 = vrcp.pop %v577
    %v583 = vmul.f32 1.0, %v582
    %v584 = vrcp.pop %v578
    %v585 = vmul.f32 1.0, %v584
    %v586 = vrcp.pop %v579
    %v587 = vmul.f32 1.0, %v586
    %v588 = vadd.f32 %v549, %v147
    %v590 = vrot.slane %v588, 1
    %v591 = vrot.slane %v588, 2
    %v592 = vrot.slane %v588, 3
    %593 = vrot.lane.b32.xlu0 %v588, 64
    %v594 = vpop.permute.xlu0 %593
    %595 = vrot.lane.b32.xlu0 %v590, 64
    %v596 = vpop.permute.xlu0 %595
    %597 = vrot.lane.b32.xlu0 %v591, 64
    %v598 = vpop.permute.xlu0 %597
    %599 = vrot.lane.b32.xlu0 %v592, 64
    %v600 = vpop.permute.xlu0 %599
    %v605 = vmul.f32 %v581, %v594
    %v606 = vmul.f32 %v583, %v596
    %v607 = vmul.f32 %v585, %v598
    %v608 = vmul.f32 %v587, %v600
    %613 = vrot.lane.b32.xlu0 %v605, 64
    %v614 = vpop.permute.xlu0 %613
    %615 = vrot.lane.b32.xlu0 %v606, 64
    %v616 = vpop.permute.xlu0 %615
    %617 = vrot.lane.b32.xlu0 %v607, 64
    %v618 = vpop.permute.xlu0 %617
    %619 = vrot.lane.b32.xlu0 %v608, 64
    %v620 = vpop.permute.xlu0 %619
    %v625 = vadd.f32 %v464, %v614
    %v626 = vadd.f32 %v465, %v616
    %v627 = vadd.f32 %v466, %v618
    %v628 = vadd.f32 %v467, %v620
    %v629 = vtanh.pop %v625
    %v630 = vtanh.pop %v626
    %v631 = vtanh.pop %v627
    %v632 = vtanh.pop %v628
    %v633 = vsub.f32 %v460, %v629
    %v634 = vsub.f32 %v461, %v630
    %v635 = vsub.f32 %v462, %v631
    %v636 = vsub.f32 %v463, %v632
    %641 = vrot.lane.b32.xlu0 %v633, 96
    %v642 = vpop.permute.xlu0 %641
    %643 = vrot.lane.b32.xlu0 %v634, 96
    %v644 = vpop.permute.xlu0 %643
    %645 = vrot.lane.b32.xlu0 %v635, 96
    %v646 = vpop.permute.xlu0 %645
    %647 = vrot.lane.b32.xlu0 %v636, 96
    %v648 = vpop.permute.xlu0 %647
    %v653 = vmul.f32 %v581, %v642
    %v654 = vmul.f32 %v583, %v644
    %v655 = vmul.f32 %v585, %v646
    %v656 = vmul.f32 %v587, %v648
    %661 = vrot.lane.b32.xlu0 %v653, 32
    %v662 = vpop.permute.xlu0 %661
    %663 = vrot.lane.b32.xlu0 %v654, 32
    %v664 = vpop.permute.xlu0 %663
    %665 = vrot.lane.b32.xlu0 %v655, 32
    %v666 = vpop.permute.xlu0 %665
    %667 = vrot.lane.b32.xlu0 %v656, 32
    %v668 = vpop.permute.xlu0 %667
    %v673 = vadd.f32 %v629, %v662
    %v674 = vadd.f32 %v630, %v664
    %v675 = vadd.f32 %v631, %v666
    %v676 = vadd.f32 %v632, %v668
    %v677 = vld [vmem:[%s0 + $0x3] sm:$0x1]
    %v678 = vld [vmem:[%s0 + $0xb] sm:$0x1]
    %v679 = vld [vmem:[%s0 + $0x13] sm:$0x1]
    %v680 = vld [vmem:[%s0 + $0x1b] sm:$0x1]
    %v685 = vrot.slane %v674, 7
    %v686 = vsel %vm199, %v685, %v673
    %v687 = vrot.slane %v675, 6
    %v688 = vsel %vm202, %v687, %v686
    %v689 = vrot.slane %v676, 5
    %v690 = vsel %vm205, %v689, %v688
    %691 = vrot.lane.b32.xlu0 %v690, 64
    %v692 = vpop.permute.xlu0 %691
    %v693 = vsel %vm31, %v692, 0
    %695 = vmatprep.subr.mxu0 0.0
    %696 = vmatpush1.msra.mxu0 %v22
    %697 = vmatprep.subr.mxu0 0.0
    %698 = vmatpush1.msra.mxu0 %v23
    %699 = vmatprep.subr.mxu0 0.0
    %700 = vmatpush1.msra.mxu0 %v24
    %701 = vmatprep.subr.mxu0 0.0
    %702 = vmatpush1.msra.mxu0 %v25
    %703 = vmatprep.subr.mxu0 0.0
    %704 = vmatpush1.msra.mxu0 0.0
    %705 = vmatprep.subr.mxu0 0.0
    %706 = vmatpush1.msra.mxu0 0.0
    %707 = vmatprep.subr.mxu0 0.0
    %708 = vmatpush1.msra.mxu0 0.0
    %709 = vmatprep.subr.mxu0 0.0
    %710 = vmatpush1.msra.mxu0 0.0
    %711 = vmatprep.subr.mxu0 0.0
    %712 = vmatpush1.msra.mxu0 0.0
    %713 = vmatprep.subr.mxu0 0.0
    %714 = vmatpush1.msra.mxu0 0.0
    %715 = vmatprep.subr.mxu0 0.0
    %716 = vmatpush1.msra.mxu0 0.0
    %717 = vmatprep.subr.mxu0 0.0
    %718 = vmatpush1.msra.mxu0 0.0
    %719 = vmatprep.subr.mxu0 0.0
    %720 = vmatpush1.msra.mxu0 0.0
    %721 = vmatprep.subr.mxu0 0.0
    %722 = vmatpush1.msra.mxu0 0.0
    %723 = vmatprep.subr.mxu0 0.0
    %724 = vmatpush1.msra.mxu0 0.0
    %725 = vmatprep.subr.mxu0 0.0
    %726 = vmatpush1.msra.mxu0 0.0
    %727 = vmatprep.subr.mxu0 0.0
    %728 = vmatpush1.msra.mxu0 0.0
    %729 = vmatprep.subr.mxu0 0.0
    %730 = vmatpush1.msra.mxu0 0.0
    %731 = vmatprep.subr.mxu0 0.0
    %732 = vmatpush1.msra.mxu0 0.0
    %733 = vmatprep.subr.mxu0 0.0
    %734 = vmatpush1.msra.mxu0 0.0
    %735 = vmatprep.subr.mxu0 0.0
    %736 = vmatpush1.msra.mxu0 0.0
    %737 = vmatprep.subr.mxu0 0.0
    %738 = vmatpush1.msra.mxu0 0.0
    %739 = vmatprep.subr.mxu0 0.0
    %740 = vmatpush1.msra.mxu0 0.0
    %741 = vmatprep.subr.mxu0 0.0
    %742 = vmatpush1.msra.mxu0 0.0
    %743 = vmatprep.subr.mxu0 0.0
    %744 = vmatpush1.msra.mxu0 0.0
    %745 = vmatprep.subr.mxu0 0.0
    %746 = vmatpush1.msra.mxu0 0.0
    %747 = vmatprep.subr.mxu0 0.0
    %748 = vmatpush1.msra.mxu0 0.0
    %749 = vmatprep.subr.mxu0 0.0
    %750 = vmatpush1.msra.mxu0 0.0
    %751 = vmatprep.subr.mxu0 0.0
    %752 = vmatpush1.msra.mxu0 0.0
    %753 = vmatprep.subr.mxu0 0.0
    %754 = vmatpush1.msra.mxu0 0.0
    %755 = vmatprep.subr.mxu0 0.0
    %756 = vmatpush1.msra.mxu0 0.0
    %757 = vmatprep.subr.mxu0 0.0
    %758 = vmatpush1.msra.mxu0 0.0
    %759 = vmatprep.mubr.f32.mxu0 0.0
    %760 = vmatmul.mubr.f32.gmra.mrb[0].mxu0 %v693
    %v761 = vpop.f32.mrb[0].mxu0
    %v762 = vadd.f32 0.0, %v761
    %v763 = vpop.f32.mrb[0].mxu0
    %764 = vdwg.mxu0
    %v766 = vrot.slane %v762, 1
    %v767 = vrot.slane %v762, 2
    %v768 = vrot.slane %v762, 3
    %v773 = vadd.f32 %v677, %v762
    %v774 = vadd.f32 %v678, %v766
    %v775 = vadd.f32 %v679, %v767
    %v776 = vadd.f32 %v680, %v768
    %v777 = vxor.u32 %v773, 2147483648
    %v778 = vxor.u32 %v774, 2147483648
    %v779 = vxor.u32 %v775, 2147483648
    %v780 = vxor.u32 %v776, 2147483648
    %v781 = vmul.f32 %v777, 1.442695
    %v782 = vpow.pop %v781
    %v783 = vmul.f32 %v778, 1.442695
    %v784 = vpow.pop %v783
    %v785 = vmul.f32 %v779, 1.442695
    %v786 = vpow.pop %v785
    %v787 = vmul.f32 %v780, 1.442695
    %v788 = vpow.pop %v787
    %v789 = vadd.f32 %v782, 1.0
    %v790 = vadd.f32 %v784, 1.0
    %v791 = vadd.f32 %v786, 1.0
    %v792 = vadd.f32 %v788, 1.0
    %v793 = vrcp.pop %v789
    %v794 = vmul.f32 1.0, %v793
    %v795 = vrcp.pop %v790
    %v796 = vmul.f32 1.0, %v795
    %v797 = vrcp.pop %v791
    %v798 = vmul.f32 1.0, %v797
    %v799 = vrcp.pop %v792
    %v800 = vmul.f32 1.0, %v799
    %v801 = vadd.f32 %v762, %v147
    %v803 = vrot.slane %v801, 1
    %v804 = vrot.slane %v801, 2
    %v805 = vrot.slane %v801, 3
    %806 = vrot.lane.b32.xlu0 %v801, 64
    %v807 = vpop.permute.xlu0 %806
    %808 = vrot.lane.b32.xlu0 %v803, 64
    %v809 = vpop.permute.xlu0 %808
    %810 = vrot.lane.b32.xlu0 %v804, 64
    %v811 = vpop.permute.xlu0 %810
    %812 = vrot.lane.b32.xlu0 %v805, 64
    %v813 = vpop.permute.xlu0 %812
    %v818 = vmul.f32 %v794, %v807
    %v819 = vmul.f32 %v796, %v809
    %v820 = vmul.f32 %v798, %v811
    %v821 = vmul.f32 %v800, %v813
    %826 = vrot.lane.b32.xlu0 %v818, 64
    %v827 = vpop.permute.xlu0 %826
    %828 = vrot.lane.b32.xlu0 %v819, 64
    %v829 = vpop.permute.xlu0 %828
    %830 = vrot.lane.b32.xlu0 %v820, 64
    %v831 = vpop.permute.xlu0 %830
    %832 = vrot.lane.b32.xlu0 %v821, 64
    %v833 = vpop.permute.xlu0 %832
    %v838 = vadd.f32 %v677, %v827
    %v839 = vadd.f32 %v678, %v829
    %v840 = vadd.f32 %v679, %v831
    %v841 = vadd.f32 %v680, %v833
    %v842 = vtanh.pop %v838
    %v843 = vtanh.pop %v839
    %v844 = vtanh.pop %v840
    %v845 = vtanh.pop %v841
    %v846 = vsub.f32 %v673, %v842
    %v847 = vsub.f32 %v674, %v843
    %v848 = vsub.f32 %v675, %v844
    %v849 = vsub.f32 %v676, %v845
    %854 = vrot.lane.b32.xlu0 %v846, 96
    %v855 = vpop.permute.xlu0 %854
    %856 = vrot.lane.b32.xlu0 %v847, 96
    %v857 = vpop.permute.xlu0 %856
    %858 = vrot.lane.b32.xlu0 %v848, 96
    %v859 = vpop.permute.xlu0 %858
    %860 = vrot.lane.b32.xlu0 %v849, 96
    %v861 = vpop.permute.xlu0 %860
    %v866 = vmul.f32 %v794, %v855
    %v867 = vmul.f32 %v796, %v857
    %v868 = vmul.f32 %v798, %v859
    %v869 = vmul.f32 %v800, %v861
    %874 = vrot.lane.b32.xlu0 %v866, 32
    %v875 = vpop.permute.xlu0 %874
    %876 = vrot.lane.b32.xlu0 %v867, 32
    %v877 = vpop.permute.xlu0 %876
    %878 = vrot.lane.b32.xlu0 %v868, 32
    %v879 = vpop.permute.xlu0 %878
    %880 = vrot.lane.b32.xlu0 %v869, 32
    %v881 = vpop.permute.xlu0 %880
    %v886 = vadd.f32 %v842, %v875
    %v887 = vadd.f32 %v843, %v877
    %v888 = vadd.f32 %v844, %v879
    %v889 = vadd.f32 %v845, %v881
    %v890 = vld [vmem:[%s0 + $0x4] sm:$0x1]
    %v891 = vld [vmem:[%s0 + $0xc] sm:$0x1]
    %v892 = vld [vmem:[%s0 + $0x14] sm:$0x1]
    %v893 = vld [vmem:[%s0 + $0x1c] sm:$0x1]
    %v898 = vrot.slane %v887, 7
    %v899 = vsel %vm199, %v898, %v886
    %v900 = vrot.slane %v888, 6
    %v901 = vsel %vm202, %v900, %v899
    %v902 = vrot.slane %v889, 5
    %v903 = vsel %vm205, %v902, %v901
    %904 = vrot.lane.b32.xlu0 %v903, 64
    %v905 = vpop.permute.xlu0 %904
    %v906 = vsel %vm31, %v905, 0
    %908 = vmatprep.subr.mxu0 0.0
    %909 = vmatpush1.msra.mxu0 %v22
    %910 = vmatprep.subr.mxu0 0.0
    %911 = vmatpush1.msra.mxu0 %v23
    %912 = vmatprep.subr.mxu0 0.0
    %913 = vmatpush1.msra.mxu0 %v24
    %914 = vmatprep.subr.mxu0 0.0
    %915 = vmatpush1.msra.mxu0 %v25
    %916 = vmatprep.subr.mxu0 0.0
    %917 = vmatpush1.msra.mxu0 0.0
    %918 = vmatprep.subr.mxu0 0.0
    %919 = vmatpush1.msra.mxu0 0.0
    %920 = vmatprep.subr.mxu0 0.0
    %921 = vmatpush1.msra.mxu0 0.0
    %922 = vmatprep.subr.mxu0 0.0
    %923 = vmatpush1.msra.mxu0 0.0
    %924 = vmatprep.subr.mxu0 0.0
    %925 = vmatpush1.msra.mxu0 0.0
    %926 = vmatprep.subr.mxu0 0.0
    %927 = vmatpush1.msra.mxu0 0.0
    %928 = vmatprep.subr.mxu0 0.0
    %929 = vmatpush1.msra.mxu0 0.0
    %930 = vmatprep.subr.mxu0 0.0
    %931 = vmatpush1.msra.mxu0 0.0
    %932 = vmatprep.subr.mxu0 0.0
    %933 = vmatpush1.msra.mxu0 0.0
    %934 = vmatprep.subr.mxu0 0.0
    %935 = vmatpush1.msra.mxu0 0.0
    %936 = vmatprep.subr.mxu0 0.0
    %937 = vmatpush1.msra.mxu0 0.0
    %938 = vmatprep.subr.mxu0 0.0
    %939 = vmatpush1.msra.mxu0 0.0
    %940 = vmatprep.subr.mxu0 0.0
    %941 = vmatpush1.msra.mxu0 0.0
    %942 = vmatprep.subr.mxu0 0.0
    %943 = vmatpush1.msra.mxu0 0.0
    %944 = vmatprep.subr.mxu0 0.0
    %945 = vmatpush1.msra.mxu0 0.0
    %946 = vmatprep.subr.mxu0 0.0
    %947 = vmatpush1.msra.mxu0 0.0
    %948 = vmatprep.subr.mxu0 0.0
    %949 = vmatpush1.msra.mxu0 0.0
    %950 = vmatprep.subr.mxu0 0.0
    %951 = vmatpush1.msra.mxu0 0.0
    %952 = vmatprep.subr.mxu0 0.0
    %953 = vmatpush1.msra.mxu0 0.0
    %954 = vmatprep.subr.mxu0 0.0
    %955 = vmatpush1.msra.mxu0 0.0
    %956 = vmatprep.subr.mxu0 0.0
    %957 = vmatpush1.msra.mxu0 0.0
    %958 = vmatprep.subr.mxu0 0.0
    %959 = vmatpush1.msra.mxu0 0.0
    %960 = vmatprep.subr.mxu0 0.0
    %961 = vmatpush1.msra.mxu0 0.0
    %962 = vmatprep.subr.mxu0 0.0
    %963 = vmatpush1.msra.mxu0 0.0
    %964 = vmatprep.subr.mxu0 0.0
    %965 = vmatpush1.msra.mxu0 0.0
    %966 = vmatprep.subr.mxu0 0.0
    %967 = vmatpush1.msra.mxu0 0.0
    %968 = vmatprep.subr.mxu0 0.0
    %969 = vmatpush1.msra.mxu0 0.0
    %970 = vmatprep.subr.mxu0 0.0
    %971 = vmatpush1.msra.mxu0 0.0
    %972 = vmatprep.mubr.f32.mxu0 0.0
    %973 = vmatmul.mubr.f32.gmra.mrb[0].mxu0 %v906
    %v974 = vpop.f32.mrb[0].mxu0
    %v975 = vadd.f32 0.0, %v974
    %v976 = vpop.f32.mrb[0].mxu0
    %977 = vdwg.mxu0
    %v979 = vrot.slane %v975, 1
    %v980 = vrot.slane %v975, 2
    %v981 = vrot.slane %v975, 3
    %v986 = vadd.f32 %v890, %v975
    %v987 = vadd.f32 %v891, %v979
    %v988 = vadd.f32 %v892, %v980
    %v989 = vadd.f32 %v893, %v981
    %v990 = vxor.u32 %v986, 2147483648
    %v991 = vxor.u32 %v987, 2147483648
    %v992 = vxor.u32 %v988, 2147483648
    %v993 = vxor.u32 %v989, 2147483648
    %v994 = vmul.f32 %v990, 1.442695
    %v995 = vpow.pop %v994
    %v996 = vmul.f32 %v991, 1.442695
    %v997 = vpow.pop %v996
    %v998 = vmul.f32 %v992, 1.442695
    %v999 = vpow.pop %v998
    %v1000 = vmul.f32 %v993, 1.442695
    %v1001 = vpow.pop %v1000
    %v1002 = vadd.f32 %v995, 1.0
    %v1003 = vadd.f32 %v997, 1.0
    %v1004 = vadd.f32 %v999, 1.0
    %v1005 = vadd.f32 %v1001, 1.0
    %v1006 = vrcp.pop %v1002
    %v1007 = vmul.f32 1.0, %v1006
    %v1008 = vrcp.pop %v1003
    %v1009 = vmul.f32 1.0, %v1008
    %v1010 = vrcp.pop %v1004
    %v1011 = vmul.f32 1.0, %v1010
    %v1012 = vrcp.pop %v1005
    %v1013 = vmul.f32 1.0, %v1012
    %v1014 = vadd.f32 %v975, %v147
    %v1016 = vrot.slane %v1014, 1
    %v1017 = vrot.slane %v1014, 2
    %v1018 = vrot.slane %v1014, 3
    %1019 = vrot.lane.b32.xlu0 %v1014, 64
    %v1020 = vpop.permute.xlu0 %1019
    %1021 = vrot.lane.b32.xlu0 %v1016, 64
    %v1022 = vpop.permute.xlu0 %1021
    %1023 = vrot.lane.b32.xlu0 %v1017, 64
    %v1024 = vpop.permute.xlu0 %1023
    %1025 = vrot.lane.b32.xlu0 %v1018, 64
    %v1026 = vpop.permute.xlu0 %1025
    %v1031 = vmul.f32 %v1007, %v1020
    %v1032 = vmul.f32 %v1009, %v1022
    %v1033 = vmul.f32 %v1011, %v1024
    %v1034 = vmul.f32 %v1013, %v1026
    %1039 = vrot.lane.b32.xlu0 %v1031, 64
    %v1040 = vpop.permute.xlu0 %1039
    %1041 = vrot.lane.b32.xlu0 %v1032, 64
    %v1042 = vpop.permute.xlu0 %1041
    %1043 = vrot.lane.b32.xlu0 %v1033, 64
    %v1044 = vpop.permute.xlu0 %1043
    %1045 = vrot.lane.b32.xlu0 %v1034, 64
    %v1046 = vpop.permute.xlu0 %1045
    %v1051 = vadd.f32 %v890, %v1040
    %v1052 = vadd.f32 %v891, %v1042
    %v1053 = vadd.f32 %v892, %v1044
    %v1054 = vadd.f32 %v893, %v1046
    %v1055 = vtanh.pop %v1051
    %v1056 = vtanh.pop %v1052
    %v1057 = vtanh.pop %v1053
    %v1058 = vtanh.pop %v1054
    %v1059 = vsub.f32 %v886, %v1055
    %v1060 = vsub.f32 %v887, %v1056
    %v1061 = vsub.f32 %v888, %v1057
    %v1062 = vsub.f32 %v889, %v1058
    %1067 = vrot.lane.b32.xlu0 %v1059, 96
    %v1068 = vpop.permute.xlu0 %1067
    %1069 = vrot.lane.b32.xlu0 %v1060, 96
    %v1070 = vpop.permute.xlu0 %1069
    %1071 = vrot.lane.b32.xlu0 %v1061, 96
    %v1072 = vpop.permute.xlu0 %1071
    %1073 = vrot.lane.b32.xlu0 %v1062, 96
    %v1074 = vpop.permute.xlu0 %1073
    %v1079 = vmul.f32 %v1007, %v1068
    %v1080 = vmul.f32 %v1009, %v1070
    %v1081 = vmul.f32 %v1011, %v1072
    %v1082 = vmul.f32 %v1013, %v1074
    %1087 = vrot.lane.b32.xlu0 %v1079, 32
    %v1088 = vpop.permute.xlu0 %1087
    %1089 = vrot.lane.b32.xlu0 %v1080, 32
    %v1090 = vpop.permute.xlu0 %1089
    %1091 = vrot.lane.b32.xlu0 %v1081, 32
    %v1092 = vpop.permute.xlu0 %1091
    %1093 = vrot.lane.b32.xlu0 %v1082, 32
    %v1094 = vpop.permute.xlu0 %1093
    %v1099 = vadd.f32 %v1055, %v1088
    %v1100 = vadd.f32 %v1056, %v1090
    %v1101 = vadd.f32 %v1057, %v1092
    %v1102 = vadd.f32 %v1058, %v1094
    %v1103 = vld [vmem:[%s0 + $0x5] sm:$0x1]
    %v1104 = vld [vmem:[%s0 + $0xd] sm:$0x1]
    %v1105 = vld [vmem:[%s0 + $0x15] sm:$0x1]
    %v1106 = vld [vmem:[%s0 + $0x1d] sm:$0x1]
    %v1111 = vrot.slane %v1100, 7
    %v1112 = vsel %vm199, %v1111, %v1099
    %v1113 = vrot.slane %v1101, 6
    %v1114 = vsel %vm202, %v1113, %v1112
    %v1115 = vrot.slane %v1102, 5
    %v1116 = vsel %vm205, %v1115, %v1114
    %1117 = vrot.lane.b32.xlu0 %v1116, 64
    %v1118 = vpop.permute.xlu0 %1117
    %v1119 = vsel %vm31, %v1118, 0
    %1121 = vmatprep.subr.mxu0 0.0
    %1122 = vmatpush1.msra.mxu0 %v22
    %1123 = vmatprep.subr.mxu0 0.0
    %1124 = vmatpush1.msra.mxu0 %v23
    %1125 = vmatprep.subr.mxu0 0.0
    %1126 = vmatpush1.msra.mxu0 %v24
    %1127 = vmatprep.subr.mxu0 0.0
    %1128 = vmatpush1.msra.mxu0 %v25
    %1129 = vmatprep.subr.mxu0 0.0
    %1130 = vmatpush1.msra.mxu0 0.0
    %1131 = vmatprep.subr.mxu0 0.0
    %1132 = vmatpush1.msra.mxu0 0.0
    %1133 = vmatprep.subr.mxu0 0.0
    %1134 = vmatpush1.msra.mxu0 0.0
    %1135 = vmatprep.subr.mxu0 0.0
    %1136 = vmatpush1.msra.mxu0 0.0
    %1137 = vmatprep.subr.mxu0 0.0
    %1138 = vmatpush1.msra.mxu0 0.0
    %1139 = vmatprep.subr.mxu0 0.0
    %1140 = vmatpush1.msra.mxu0 0.0
    %1141 = vmatprep.subr.mxu0 0.0
    %1142 = vmatpush1.msra.mxu0 0.0
    %1143 = vmatprep.subr.mxu0 0.0
    %1144 = vmatpush1.msra.mxu0 0.0
    %1145 = vmatprep.subr.mxu0 0.0
    %1146 = vmatpush1.msra.mxu0 0.0
    %1147 = vmatprep.subr.mxu0 0.0
    %1148 = vmatpush1.msra.mxu0 0.0
    %1149 = vmatprep.subr.mxu0 0.0
    %1150 = vmatpush1.msra.mxu0 0.0
    %1151 = vmatprep.subr.mxu0 0.0
    %1152 = vmatpush1.msra.mxu0 0.0
    %1153 = vmatprep.subr.mxu0 0.0
    %1154 = vmatpush1.msra.mxu0 0.0
    %1155 = vmatprep.subr.mxu0 0.0
    %1156 = vmatpush1.msra.mxu0 0.0
    %1157 = vmatprep.subr.mxu0 0.0
    %1158 = vmatpush1.msra.mxu0 0.0
    %1159 = vmatprep.subr.mxu0 0.0
    %1160 = vmatpush1.msra.mxu0 0.0
    %1161 = vmatprep.subr.mxu0 0.0
    %1162 = vmatpush1.msra.mxu0 0.0
    %1163 = vmatprep.subr.mxu0 0.0
    %1164 = vmatpush1.msra.mxu0 0.0
    %1165 = vmatprep.subr.mxu0 0.0
    %1166 = vmatpush1.msra.mxu0 0.0
    %1167 = vmatprep.subr.mxu0 0.0
    %1168 = vmatpush1.msra.mxu0 0.0
    %1169 = vmatprep.subr.mxu0 0.0
    %1170 = vmatpush1.msra.mxu0 0.0
    %1171 = vmatprep.subr.mxu0 0.0
    %1172 = vmatpush1.msra.mxu0 0.0
    %1173 = vmatprep.subr.mxu0 0.0
    %1174 = vmatpush1.msra.mxu0 0.0
    %1175 = vmatprep.subr.mxu0 0.0
    %1176 = vmatpush1.msra.mxu0 0.0
    %1177 = vmatprep.subr.mxu0 0.0
    %1178 = vmatpush1.msra.mxu0 0.0
    %1179 = vmatprep.subr.mxu0 0.0
    %1180 = vmatpush1.msra.mxu0 0.0
    %1181 = vmatprep.subr.mxu0 0.0
    %1182 = vmatpush1.msra.mxu0 0.0
    %1183 = vmatprep.subr.mxu0 0.0
    %1184 = vmatpush1.msra.mxu0 0.0
    %1185 = vmatprep.mubr.f32.mxu0 0.0
    %1186 = vmatmul.mubr.f32.gmra.mrb[0].mxu0 %v1119
    %v1187 = vpop.f32.mrb[0].mxu0
    %v1188 = vadd.f32 0.0, %v1187
    %v1189 = vpop.f32.mrb[0].mxu0
    %1190 = vdwg.mxu0
    %v1192 = vrot.slane %v1188, 1
    %v1193 = vrot.slane %v1188, 2
    %v1194 = vrot.slane %v1188, 3
    %v1199 = vadd.f32 %v1103, %v1188
    %v1200 = vadd.f32 %v1104, %v1192
    %v1201 = vadd.f32 %v1105, %v1193
    %v1202 = vadd.f32 %v1106, %v1194
    %v1203 = vxor.u32 %v1199, 2147483648
    %v1204 = vxor.u32 %v1200, 2147483648
    %v1205 = vxor.u32 %v1201, 2147483648
    %v1206 = vxor.u32 %v1202, 2147483648
    %v1207 = vmul.f32 %v1203, 1.442695
    %v1208 = vpow.pop %v1207
    %v1209 = vmul.f32 %v1204, 1.442695
    %v1210 = vpow.pop %v1209
    %v1211 = vmul.f32 %v1205, 1.442695
    %v1212 = vpow.pop %v1211
    %v1213 = vmul.f32 %v1206, 1.442695
    %v1214 = vpow.pop %v1213
    %v1215 = vadd.f32 %v1208, 1.0
    %v1216 = vadd.f32 %v1210, 1.0
    %v1217 = vadd.f32 %v1212, 1.0
    %v1218 = vadd.f32 %v1214, 1.0
    %v1219 = vrcp.pop %v1215
    %v1220 = vmul.f32 1.0, %v1219
    %v1221 = vrcp.pop %v1216
    %v1222 = vmul.f32 1.0, %v1221
    %v1223 = vrcp.pop %v1217
    %v1224 = vmul.f32 1.0, %v1223
    %v1225 = vrcp.pop %v1218
    %v1226 = vmul.f32 1.0, %v1225
    %v1227 = vadd.f32 %v1188, %v147
    %v1229 = vrot.slane %v1227, 1
    %v1230 = vrot.slane %v1227, 2
    %v1231 = vrot.slane %v1227, 3
    %1232 = vrot.lane.b32.xlu0 %v1227, 64
    %v1233 = vpop.permute.xlu0 %1232
    %1234 = vrot.lane.b32.xlu0 %v1229, 64
    %v1235 = vpop.permute.xlu0 %1234
    %1236 = vrot.lane.b32.xlu0 %v1230, 64
    %v1237 = vpop.permute.xlu0 %1236
    %1238 = vrot.lane.b32.xlu0 %v1231, 64
    %v1239 = vpop.permute.xlu0 %1238
    %v1244 = vmul.f32 %v1220, %v1233
    %v1245 = vmul.f32 %v1222, %v1235
    %v1246 = vmul.f32 %v1224, %v1237
    %v1247 = vmul.f32 %v1226, %v1239
    %1252 = vrot.lane.b32.xlu0 %v1244, 64
    %v1253 = vpop.permute.xlu0 %1252
    %1254 = vrot.lane.b32.xlu0 %v1245, 64
    %v1255 = vpop.permute.xlu0 %1254
    %1256 = vrot.lane.b32.xlu0 %v1246, 64
    %v1257 = vpop.permute.xlu0 %1256
    %1258 = vrot.lane.b32.xlu0 %v1247, 64
    %v1259 = vpop.permute.xlu0 %1258
    %v1264 = vadd.f32 %v1103, %v1253
    %v1265 = vadd.f32 %v1104, %v1255
    %v1266 = vadd.f32 %v1105, %v1257
    %v1267 = vadd.f32 %v1106, %v1259
    %v1268 = vtanh.pop %v1264
    %v1269 = vtanh.pop %v1265
    %v1270 = vtanh.pop %v1266
    %v1271 = vtanh.pop %v1267
    %v1272 = vsub.f32 %v1099, %v1268
    %v1273 = vsub.f32 %v1100, %v1269
    %v1274 = vsub.f32 %v1101, %v1270
    %v1275 = vsub.f32 %v1102, %v1271
    %1280 = vrot.lane.b32.xlu0 %v1272, 96
    %v1281 = vpop.permute.xlu0 %1280
    %1282 = vrot.lane.b32.xlu0 %v1273, 96
    %v1283 = vpop.permute.xlu0 %1282
    %1284 = vrot.lane.b32.xlu0 %v1274, 96
    %v1285 = vpop.permute.xlu0 %1284
    %1286 = vrot.lane.b32.xlu0 %v1275, 96
    %v1287 = vpop.permute.xlu0 %1286
    %v1292 = vmul.f32 %v1220, %v1281
    %v1293 = vmul.f32 %v1222, %v1283
    %v1294 = vmul.f32 %v1224, %v1285
    %v1295 = vmul.f32 %v1226, %v1287
    %1300 = vrot.lane.b32.xlu0 %v1292, 32
    %v1301 = vpop.permute.xlu0 %1300
    %1302 = vrot.lane.b32.xlu0 %v1293, 32
    %v1303 = vpop.permute.xlu0 %1302
    %1304 = vrot.lane.b32.xlu0 %v1294, 32
    %v1305 = vpop.permute.xlu0 %1304
    %1306 = vrot.lane.b32.xlu0 %v1295, 32
    %v1307 = vpop.permute.xlu0 %1306
    %v1312 = vadd.f32 %v1268, %v1301
    %v1313 = vadd.f32 %v1269, %v1303
    %v1314 = vadd.f32 %v1270, %v1305
    %v1315 = vadd.f32 %v1271, %v1307
    %v1316 = vld [vmem:[%s0 + $0x6] sm:$0x1]
    %v1317 = vld [vmem:[%s0 + $0xe] sm:$0x1]
    %v1318 = vld [vmem:[%s0 + $0x16] sm:$0x1]
    %v1319 = vld [vmem:[%s0 + $0x1e] sm:$0x1]
    %v1324 = vrot.slane %v1313, 7
    %v1325 = vsel %vm199, %v1324, %v1312
    %v1326 = vrot.slane %v1314, 6
    %v1327 = vsel %vm202, %v1326, %v1325
    %v1328 = vrot.slane %v1315, 5
    %v1329 = vsel %vm205, %v1328, %v1327
    %1330 = vrot.lane.b32.xlu0 %v1329, 64
    %v1331 = vpop.permute.xlu0 %1330
    %v1332 = vsel %vm31, %v1331, 0
    %1334 = vmatprep.subr.mxu0 0.0
    %1335 = vmatpush1.msra.mxu0 %v22
    %1336 = vmatprep.subr.mxu0 0.0
    %1337 = vmatpush1.msra.mxu0 %v23
    %1338 = vmatprep.subr.mxu0 0.0
    %1339 = vmatpush1.msra.mxu0 %v24
    %1340 = vmatprep.subr.mxu0 0.0
    %1341 = vmatpush1.msra.mxu0 %v25
    %1342 = vmatprep.subr.mxu0 0.0
    %1343 = vmatpush1.msra.mxu0 0.0
    %1344 = vmatprep.subr.mxu0 0.0
    %1345 = vmatpush1.msra.mxu0 0.0
    %1346 = vmatprep.subr.mxu0 0.0
    %1347 = vmatpush1.msra.mxu0 0.0
    %1348 = vmatprep.subr.mxu0 0.0
    %1349 = vmatpush1.msra.mxu0 0.0
    %1350 = vmatprep.subr.mxu0 0.0
    %1351 = vmatpush1.msra.mxu0 0.0
    %1352 = vmatprep.subr.mxu0 0.0
    %1353 = vmatpush1.msra.mxu0 0.0
    %1354 = vmatprep.subr.mxu0 0.0
    %1355 = vmatpush1.msra.mxu0 0.0
    %1356 = vmatprep.subr.mxu0 0.0
    %1357 = vmatpush1.msra.mxu0 0.0
    %1358 = vmatprep.subr.mxu0 0.0
    %1359 = vmatpush1.msra.mxu0 0.0
    %1360 = vmatprep.subr.mxu0 0.0
    %1361 = vmatpush1.msra.mxu0 0.0
    %1362 = vmatprep.subr.mxu0 0.0
    %1363 = vmatpush1.msra.mxu0 0.0
    %1364 = vmatprep.subr.mxu0 0.0
    %1365 = vmatpush1.msra.mxu0 0.0
    %1366 = vmatprep.subr.mxu0 0.0
    %1367 = vmatpush1.msra.mxu0 0.0
    %1368 = vmatprep.subr.mxu0 0.0
    %1369 = vmatpush1.msra.mxu0 0.0
    %1370 = vmatprep.subr.mxu0 0.0
    %1371 = vmatpush1.msra.mxu0 0.0
    %1372 = vmatprep.subr.mxu0 0.0
    %1373 = vmatpush1.msra.mxu0 0.0
    %1374 = vmatprep.subr.mxu0 0.0
    %1375 = vmatpush1.msra.mxu0 0.0
    %1376 = vmatprep.subr.mxu0 0.0
    %1377 = vmatpush1.msra.mxu0 0.0
    %1378 = vmatprep.subr.mxu0 0.0
    %1379 = vmatpush1.msra.mxu0 0.0
    %1380 = vmatprep.subr.mxu0 0.0
    %1381 = vmatpush1.msra.mxu0 0.0
    %1382 = vmatprep.subr.mxu0 0.0
    %1383 = vmatpush1.msra.mxu0 0.0
    %1384 = vmatprep.subr.mxu0 0.0
    %1385 = vmatpush1.msra.mxu0 0.0
    %1386 = vmatprep.subr.mxu0 0.0
    %1387 = vmatpush1.msra.mxu0 0.0
    %1388 = vmatprep.subr.mxu0 0.0
    %1389 = vmatpush1.msra.mxu0 0.0
    %1390 = vmatprep.subr.mxu0 0.0
    %1391 = vmatpush1.msra.mxu0 0.0
    %1392 = vmatprep.subr.mxu0 0.0
    %1393 = vmatpush1.msra.mxu0 0.0
    %1394 = vmatprep.subr.mxu0 0.0
    %1395 = vmatpush1.msra.mxu0 0.0
    %1396 = vmatprep.subr.mxu0 0.0
    %1397 = vmatpush1.msra.mxu0 0.0
    %1398 = vmatprep.mubr.f32.mxu0 0.0
    %1399 = vmatmul.mubr.f32.gmra.mrb[0].mxu0 %v1332
    %v1400 = vpop.f32.mrb[0].mxu0
    %v1401 = vadd.f32 0.0, %v1400
    %v1402 = vpop.f32.mrb[0].mxu0
    %1403 = vdwg.mxu0
    %v1405 = vrot.slane %v1401, 1
    %v1406 = vrot.slane %v1401, 2
    %v1407 = vrot.slane %v1401, 3
    %v1412 = vadd.f32 %v1316, %v1401
    %v1413 = vadd.f32 %v1317, %v1405
    %v1414 = vadd.f32 %v1318, %v1406
    %v1415 = vadd.f32 %v1319, %v1407
    %v1416 = vxor.u32 %v1412, 2147483648
    %v1417 = vxor.u32 %v1413, 2147483648
    %v1418 = vxor.u32 %v1414, 2147483648
    %v1419 = vxor.u32 %v1415, 2147483648
    %v1420 = vmul.f32 %v1416, 1.442695
    %v1421 = vpow.pop %v1420
    %v1422 = vmul.f32 %v1417, 1.442695
    %v1423 = vpow.pop %v1422
    %v1424 = vmul.f32 %v1418, 1.442695
    %v1425 = vpow.pop %v1424
    %v1426 = vmul.f32 %v1419, 1.442695
    %v1427 = vpow.pop %v1426
    %v1428 = vadd.f32 %v1421, 1.0
    %v1429 = vadd.f32 %v1423, 1.0
    %v1430 = vadd.f32 %v1425, 1.0
    %v1431 = vadd.f32 %v1427, 1.0
    %v1432 = vrcp.pop %v1428
    %v1433 = vmul.f32 1.0, %v1432
    %v1434 = vrcp.pop %v1429
    %v1435 = vmul.f32 1.0, %v1434
    %v1436 = vrcp.pop %v1430
    %v1437 = vmul.f32 1.0, %v1436
    %v1438 = vrcp.pop %v1431
    %v1439 = vmul.f32 1.0, %v1438
    %v1440 = vadd.f32 %v1401, %v147
    %v1442 = vrot.slane %v1440, 1
    %v1443 = vrot.slane %v1440, 2
    %v1444 = vrot.slane %v1440, 3
    %1445 = vrot.lane.b32.xlu0 %v1440, 64
    %v1446 = vpop.permute.xlu0 %1445
    %1447 = vrot.lane.b32.xlu0 %v1442, 64
    %v1448 = vpop.permute.xlu0 %1447
    %1449 = vrot.lane.b32.xlu0 %v1443, 64
    %v1450 = vpop.permute.xlu0 %1449
    %1451 = vrot.lane.b32.xlu0 %v1444, 64
    %v1452 = vpop.permute.xlu0 %1451
    %v1457 = vmul.f32 %v1433, %v1446
    %v1458 = vmul.f32 %v1435, %v1448
    %v1459 = vmul.f32 %v1437, %v1450
    %v1460 = vmul.f32 %v1439, %v1452
    %1465 = vrot.lane.b32.xlu0 %v1457, 64
    %v1466 = vpop.permute.xlu0 %1465
    %1467 = vrot.lane.b32.xlu0 %v1458, 64
    %v1468 = vpop.permute.xlu0 %1467
    %1469 = vrot.lane.b32.xlu0 %v1459, 64
    %v1470 = vpop.permute.xlu0 %1469
    %1471 = vrot.lane.b32.xlu0 %v1460, 64
    %v1472 = vpop.permute.xlu0 %1471
    %v1477 = vadd.f32 %v1316, %v1466
    %v1478 = vadd.f32 %v1317, %v1468
    %v1479 = vadd.f32 %v1318, %v1470
    %v1480 = vadd.f32 %v1319, %v1472
    %v1481 = vtanh.pop %v1477
    %v1482 = vtanh.pop %v1478
    %v1483 = vtanh.pop %v1479
    %v1484 = vtanh.pop %v1480
    %v1485 = vsub.f32 %v1312, %v1481
    %v1486 = vsub.f32 %v1313, %v1482
    %v1487 = vsub.f32 %v1314, %v1483
    %v1488 = vsub.f32 %v1315, %v1484
    %1493 = vrot.lane.b32.xlu0 %v1485, 96
    %v1494 = vpop.permute.xlu0 %1493
    %1495 = vrot.lane.b32.xlu0 %v1486, 96
    %v1496 = vpop.permute.xlu0 %1495
    %1497 = vrot.lane.b32.xlu0 %v1487, 96
    %v1498 = vpop.permute.xlu0 %1497
    %1499 = vrot.lane.b32.xlu0 %v1488, 96
    %v1500 = vpop.permute.xlu0 %1499
    %v1505 = vmul.f32 %v1433, %v1494
    %v1506 = vmul.f32 %v1435, %v1496
    %v1507 = vmul.f32 %v1437, %v1498
    %v1508 = vmul.f32 %v1439, %v1500
    %1513 = vrot.lane.b32.xlu0 %v1505, 32
    %v1514 = vpop.permute.xlu0 %1513
    %1515 = vrot.lane.b32.xlu0 %v1506, 32
    %v1516 = vpop.permute.xlu0 %1515
    %1517 = vrot.lane.b32.xlu0 %v1507, 32
    %v1518 = vpop.permute.xlu0 %1517
    %1519 = vrot.lane.b32.xlu0 %v1508, 32
    %v1520 = vpop.permute.xlu0 %1519
    %v1525 = vadd.f32 %v1481, %v1514
    %v1526 = vadd.f32 %v1482, %v1516
    %v1527 = vadd.f32 %v1483, %v1518
    %v1528 = vadd.f32 %v1484, %v1520
    %v1529 = vld [vmem:[%s0 + $0x7] sm:$0x1]
    %v1530 = vld [vmem:[%s0 + $0xf] sm:$0x1]
    %v1531 = vld [vmem:[%s0 + $0x17] sm:$0x1]
    %v1532 = vld [vmem:[%s0 + $0x1f] sm:$0x1]
    %v1537 = vrot.slane %v1526, 7
    %v1538 = vsel %vm199, %v1537, %v1525
    %v1539 = vrot.slane %v1527, 6
    %v1540 = vsel %vm202, %v1539, %v1538
    %v1541 = vrot.slane %v1528, 5
    %v1542 = vsel %vm205, %v1541, %v1540
    %1543 = vrot.lane.b32.xlu0 %v1542, 64
    %v1544 = vpop.permute.xlu0 %1543
    %v1545 = vsel %vm31, %v1544, 0
    %1547 = vmatprep.subr.mxu0 0.0
    %1548 = vmatpush1.msra.mxu0 %v22
    %1549 = vmatprep.subr.mxu0 0.0
    %1550 = vmatpush1.msra.mxu0 %v23
    %1551 = vmatprep.subr.mxu0 0.0
    %1552 = vmatpush1.msra.mxu0 %v24
    %1553 = vmatprep.subr.mxu0 0.0
    %1554 = vmatpush1.msra.mxu0 %v25
    %1555 = vmatprep.subr.mxu0 0.0
    %1556 = vmatpush1.msra.mxu0 0.0
    %1557 = vmatprep.subr.mxu0 0.0
    %1558 = vmatpush1.msra.mxu0 0.0
    %1559 = vmatprep.subr.mxu0 0.0
    %1560 = vmatpush1.msra.mxu0 0.0
    %1561 = vmatprep.subr.mxu0 0.0
    %1562 = vmatpush1.msra.mxu0 0.0
    %1563 = vmatprep.subr.mxu0 0.0
    %1564 = vmatpush1.msra.mxu0 0.0
    %1565 = vmatprep.subr.mxu0 0.0
    %1566 = vmatpush1.msra.mxu0 0.0
    %1567 = vmatprep.subr.mxu0 0.0
    %1568 = vmatpush1.msra.mxu0 0.0
    %1569 = vmatprep.subr.mxu0 0.0
    %1570 = vmatpush1.msra.mxu0 0.0
    %1571 = vmatprep.subr.mxu0 0.0
    %1572 = vmatpush1.msra.mxu0 0.0
    %1573 = vmatprep.subr.mxu0 0.0
    %1574 = vmatpush1.msra.mxu0 0.0
    %1575 = vmatprep.subr.mxu0 0.0
    %1576 = vmatpush1.msra.mxu0 0.0
    %1577 = vmatprep.subr.mxu0 0.0
    %1578 = vmatpush1.msra.mxu0 0.0
    %1579 = vmatprep.subr.mxu0 0.0
    %1580 = vmatpush1.msra.mxu0 0.0
    %1581 = vmatprep.subr.mxu0 0.0
    %1582 = vmatpush1.msra.mxu0 0.0
    %1583 = vmatprep.subr.mxu0 0.0
    %1584 = vmatpush1.msra.mxu0 0.0
    %1585 = vmatprep.subr.mxu0 0.0
    %1586 = vmatpush1.msra.mxu0 0.0
    %1587 = vmatprep.subr.mxu0 0.0
    %1588 = vmatpush1.msra.mxu0 0.0
    %1589 = vmatprep.subr.mxu0 0.0
    %1590 = vmatpush1.msra.mxu0 0.0
    %1591 = vmatprep.subr.mxu0 0.0
    %1592 = vmatpush1.msra.mxu0 0.0
    %1593 = vmatprep.subr.mxu0 0.0
    %1594 = vmatpush1.msra.mxu0 0.0
    %1595 = vmatprep.subr.mxu0 0.0
    %1596 = vmatpush1.msra.mxu0 0.0
    %1597 = vmatprep.subr.mxu0 0.0
    %1598 = vmatpush1.msra.mxu0 0.0
    %1599 = vmatprep.subr.mxu0 0.0
    %1600 = vmatpush1.msra.mxu0 0.0
    %1601 = vmatprep.subr.mxu0 0.0
    %1602 = vmatpush1.msra.mxu0 0.0
    %1603 = vmatprep.subr.mxu0 0.0
    %1604 = vmatpush1.msra.mxu0 0.0
    %1605 = vmatprep.subr.mxu0 0.0
    %1606 = vmatpush1.msra.mxu0 0.0
    %1607 = vmatprep.subr.mxu0 0.0
    %1608 = vmatpush1.msra.mxu0 0.0
    %1609 = vmatprep.subr.mxu0 0.0
    %1610 = vmatpush1.msra.mxu0 0.0
    %1611 = vmatprep.mubr.f32.mxu0 0.0
    %1612 = vmatmul.mubr.f32.gmra.mrb[0].mxu0 %v1545
    %v1613 = vpop.f32.mrb[0].mxu0
    %v1614 = vadd.f32 0.0, %v1613
    %v1615 = vpop.f32.mrb[0].mxu0
    %1616 = vdwg.mxu0
    %v1618 = vrot.slane %v1614, 1
    %v1619 = vrot.slane %v1614, 2
    %v1620 = vrot.slane %v1614, 3
    %v1625 = vadd.f32 %v1529, %v1614
    %v1626 = vadd.f32 %v1530, %v1618
    %v1627 = vadd.f32 %v1531, %v1619
    %v1628 = vadd.f32 %v1532, %v1620
    %v1629 = vxor.u32 %v1625, 2147483648
    %v1630 = vxor.u32 %v1626, 2147483648
    %v1631 = vxor.u32 %v1627, 2147483648
    %v1632 = vxor.u32 %v1628, 2147483648
    %v1633 = vmul.f32 %v1629, 1.442695
    %v1634 = vpow.pop %v1633
    %v1635 = vmul.f32 %v1630, 1.442695
    %v1636 = vpow.pop %v1635
    %v1637 = vmul.f32 %v1631, 1.442695
    %v1638 = vpow.pop %v1637
    %v1639 = vmul.f32 %v1632, 1.442695
    %v1640 = vpow.pop %v1639
    %v1641 = vadd.f32 %v1634, 1.0
    %v1642 = vadd.f32 %v1636, 1.0
    %v1643 = vadd.f32 %v1638, 1.0
    %v1644 = vadd.f32 %v1640, 1.0
    %v1645 = vrcp.pop %v1641
    %v1646 = vmul.f32 1.0, %v1645
    %v1647 = vrcp.pop %v1642
    %v1648 = vmul.f32 1.0, %v1647
    %v1649 = vrcp.pop %v1643
    %v1650 = vmul.f32 1.0, %v1649
    %v1651 = vrcp.pop %v1644
    %v1652 = vmul.f32 1.0, %v1651
    %v1653 = vadd.f32 %v1614, %v147
    %v1655 = vrot.slane %v1653, 1
    %v1656 = vrot.slane %v1653, 2
    %v1657 = vrot.slane %v1653, 3
    %1658 = vrot.lane.b32.xlu0 %v1653, 64
    %v1659 = vpop.permute.xlu0 %1658
    %1660 = vrot.lane.b32.xlu0 %v1655, 64
    %v1661 = vpop.permute.xlu0 %1660
    %1662 = vrot.lane.b32.xlu0 %v1656, 64
    %v1663 = vpop.permute.xlu0 %1662
    %1664 = vrot.lane.b32.xlu0 %v1657, 64
    %v1665 = vpop.permute.xlu0 %1664
    %v1670 = vmul.f32 %v1646, %v1659
    %v1671 = vmul.f32 %v1648, %v1661
    %v1672 = vmul.f32 %v1650, %v1663
    %v1673 = vmul.f32 %v1652, %v1665
    %1678 = vrot.lane.b32.xlu0 %v1670, 64
    %v1679 = vpop.permute.xlu0 %1678
    %1680 = vrot.lane.b32.xlu0 %v1671, 64
    %v1681 = vpop.permute.xlu0 %1680
    %1682 = vrot.lane.b32.xlu0 %v1672, 64
    %v1683 = vpop.permute.xlu0 %1682
    %1684 = vrot.lane.b32.xlu0 %v1673, 64
    %v1685 = vpop.permute.xlu0 %1684
    %v1690 = vadd.f32 %v1529, %v1679
    %v1691 = vadd.f32 %v1530, %v1681
    %v1692 = vadd.f32 %v1531, %v1683
    %v1693 = vadd.f32 %v1532, %v1685
    %v1694 = vtanh.pop %v1690
    %v1695 = vtanh.pop %v1691
    %v1696 = vtanh.pop %v1692
    %v1697 = vtanh.pop %v1693
    %v1698 = vsub.f32 %v1525, %v1694
    %v1699 = vsub.f32 %v1526, %v1695
    %v1700 = vsub.f32 %v1527, %v1696
    %v1701 = vsub.f32 %v1528, %v1697
    %1706 = vrot.lane.b32.xlu0 %v1698, 96
    %v1707 = vpop.permute.xlu0 %1706
    %1708 = vrot.lane.b32.xlu0 %v1699, 96
    %v1709 = vpop.permute.xlu0 %1708
    %1710 = vrot.lane.b32.xlu0 %v1700, 96
    %v1711 = vpop.permute.xlu0 %1710
    %1712 = vrot.lane.b32.xlu0 %v1701, 96
    %v1713 = vpop.permute.xlu0 %1712
    %v1718 = vmul.f32 %v1646, %v1707
    %v1719 = vmul.f32 %v1648, %v1709
    %v1720 = vmul.f32 %v1650, %v1711
    %v1721 = vmul.f32 %v1652, %v1713
    %1726 = vrot.lane.b32.xlu0 %v1718, 32
    %v1727 = vpop.permute.xlu0 %1726
    %1728 = vrot.lane.b32.xlu0 %v1719, 32
    %v1729 = vpop.permute.xlu0 %1728
    %1730 = vrot.lane.b32.xlu0 %v1720, 32
    %v1731 = vpop.permute.xlu0 %1730
    %1732 = vrot.lane.b32.xlu0 %v1721, 32
    %v1733 = vpop.permute.xlu0 %1732
    %v1738 = vadd.f32 %v1694, %v1727
    %v1739 = vadd.f32 %v1695, %v1729
    %v1740 = vadd.f32 %v1696, %v1731
    %v1741 = vadd.f32 %v1697, %v1733
    %v1746 = vrot.slane %v1739, 7
    %v1747 = vsel %vm199, %v1746, %v1738
    %v1748 = vrot.slane %v1740, 6
    %v1749 = vsel %vm202, %v1748, %v1747
    %v1750 = vrot.slane %v1741, 5
    %v1751 = vsel %vm205, %v1750, %v1749
    %1752 = vrot.lane.b32.xlu0 %v1751, 64
    %v1753 = vpop.permute.xlu0 %1752
    %vm1755 = vcmask 257024
    %1756 = vst.msk [vmem:[#allocation2] sm:$0xf] %vm1755, %v1753
    // Predicated region
    $region18: #{feature_extractor.3} parent=1 // pred_check
      _
    $region19: #{feature_extractor.3} parent=1 // pred_check_branch
      %1758 = sbr.rel (0) target = $region21
    $region20: #{feature_extractor.3} parent=1 // pred_region
      %s1760 = ssub.s32 64, 64
      %1761 = vsyncadd [#allocation3], %s1760
      %s1763 = sshll.u32 [#allocation2], 4
      %s1764 = int_to_ptr.vmem [resolvable:$true] %s1763
      %1766 = dma.vmem_to_hbm [thread:$0]  %s1764, 64, %s3, [#allocation3]
    $region21: #{feature_extractor.3} parent=1 // pred_fallthru
      _
    // Predicated region
    $region22: #{feature_extractor.3} parent=1 // pred_check
      _
    $region23: #{feature_extractor.3} parent=1 // pred_check_branch
      %1768 = sbr.rel (0) target = $region25
    $region24: #{feature_extractor.3} parent=1 // pred_region
      %1769 = dma.done [#allocation3], 64
    $region25: #{feature_extractor.3} parent=1 // pred_fallthru
      _
    %1770 = vsyncpa [#allocation3], 1

</llo_original>
